<compile_context>
chip_gen: v6e
topology: v6e:2x2x1
jax: 0.10.0
libtpu: 0.0.40
codegen_flags: <defaults>
</compile_context>

<pallas_src>
import math

import jax
import jax.numpy as jnp
import numpy as np
from jax import lax
from jax.experimental import pallas as pl
from jax.experimental.pallas import tpu as pltpu


TN = 1024                      # point-tile size (perf review opt #8)
_VB = 8                        # voxel block (one sublane group) for segment max
_KX = 32                       # padded width of the fused [point9 | attn18] block
_VMEM_LIMIT = 48 * 1024 * 1024  # explicit scoped-VMEM budget (opts #6/#7)


def _round_up(x, m):
    return ((x + m - 1) // m) * m


def _acc_params():
    return pltpu.CompilerParams(dimension_semantics=("arbitrary",),
                                vmem_limit_bytes=_VMEM_LIMIT)


def _par_params():
    return pltpu.CompilerParams(dimension_semantics=("parallel",),
                                vmem_limit_bytes=_VMEM_LIMIT)


# ----------------------------------------------------------------------------
# In-kernel helper: build the padded 32-wide point/attention feature block.
#   pe: (tn, 8) f32 = [x, y, z, intensity, 1.0, pvc_x, pvc_y, 0]
#   sg: (tn, 8) f32 = gathered voxel stats [sum_x, sum_y, sum_z, sum_i, cnt, ...]
# Columns of the result:
#   0..8   final_point_feature (9)  = [points(4), feature1(3), local_x, local_y]
#   9..26  final_attention_feature (18)
#   27..31 zero padding
# ----------------------------------------------------------------------------
def _build_x32(pe, sg):
    tn = pe.shape[0]
    pts4 = pe[:, 0:4]
    pvcx = pe[:, 5:6]
    pvcy = pe[:, 6:7]
    cnt = jnp.maximum(sg[:, 4:5], 1.0)
    mean4 = sg[:, 0:4] * pl.reciprocal(cnt, approx=False)       # review opt #10
    f1 = pts4[:, 0:3] - mean4[:, 0:3]
    lx = pts4[:, 0:1] - pvcx
    ly = pts4[:, 1:2] - pvcy
    z3 = jnp.zeros((tn, 3), jnp.float32)
    z5 = jnp.zeros((tn, _KX - 27), jnp.float32)
    point9 = jnp.concatenate([pts4, f1, lx, ly], axis=1)
    attn18 = jnp.concatenate(
        [f1, pts4[:, 3:4], f1, lx, ly, mean4, z3,
         mean4[:, 0:1] - pvcx, mean4[:, 1:2] - pvcy], axis=1)
    return jnp.concatenate([point9, attn18, z5], axis=1)        # (tn, 32) f32


# ----------------------------------------------------------------------------
# In-kernel helper: masked per-voxel max of sf (>= 0), bounded to [v_lo, v_hi).
# The bounds come from sorted points + scalar-prefetched per-tile ranges
# (review opt #1).  Every store is a full (8, C) aligned store.
# ----------------------------------------------------------------------------
def _segment_max_update(vmax_ref, ids, sf, v_lo, v_hi):
    koff = lax.broadcasted_iota(jnp.int32, (1, _VB), 1)
    b_lo = v_lo // _VB
    b_hi = (v_hi + _VB - 1) // _VB

    def body(vb, carry):
        v0 = pl.multiple_of(vb * _VB, _VB)
        mask = ids == (v0 + koff)                 # one broadcasted compare (opt #2)
        rows = []
        for k in range(_VB):
            # sf >= 0 (product of ReLUs), so 0.0 is a safe masked fill value.
            rows.append(jnp.max(jnp.where(mask[:, k:k + 1], sf, 0.0),
                                axis=0, keepdims=True))
        blk = jnp.concatenate(rows, axis=0)                      # (8, C)
        cur = vmax_ref[pl.ds(v0, _VB), :]
        vmax_ref[pl.ds(v0, _VB), :] = jnp.maximum(cur, blk)
        return carry

    lax.fori_loop(b_lo, b_hi, body, 0)


# ----------------------------------------------------------------------------
# Kernel 1: per-voxel [sum_x, sum_y, sum_z, sum_i, count, ...] via an exact f32
# one-hot MXU matmul.  Grid over N tiles ("arbitrary"); (V_pad, 8) output
# stays resident.
# ----------------------------------------------------------------------------
def _voxel_stats_kernel(ids_row_ref, pe_ref, stats_ref):
    @pl.when(pl.program_id(0) == 0)
    def _():
        stats_ref[...] = jnp.zeros_like(stats_ref)

    v_pad = stats_ref.shape[0]
    tn = pe_ref.shape[0]
    vox = lax.broadcasted_iota(jnp.int32, (v_pad, tn), 0)
    onehot_t = (ids_row_ref[...] == vox).astype(jnp.float32)     # (V_pad, tn)
    stats_ref[...] += jnp.dot(onehot_t, pe_ref[...],
                              preferred_element_type=jnp.float32)


def voxel_stats(ids_row, pe, v_pad, tn=TN):
    n_pad = pe.shape[0]
    return pl.pallas_call(
        _voxel_stats_kernel,
        out_shape=jax.ShapeDtypeStruct((v_pad, 8), jnp.float32),
        grid=(n_pad // tn,),
        in_specs=[pl.BlockSpec((1, tn), lambda t: (0, t)),
                  pl.BlockSpec((tn, 8), lambda t: (t, 0))],
        out_specs=pl.BlockSpec((v_pad, 8), lambda t: (0, 0)),
        compiler_params=_acc_params(),
    )(ids_row, pe)


# ----------------------------------------------------------------------------
# Kernel 2 (AVFE): fused feature assembly + block-diagonal Linear + ReLU*ReLU +
# bounded per-voxel max.  Runs on voxel-id-sorted points.
# ----------------------------------------------------------------------------
def _avfe_voxelmax_kernel(vlo_ref, vhi_ref, ids_ref, pe_ref, sg_ref, w_ref,
                          vmax_ref):
    t = pl.program_id(0)

    @pl.when(t == 0)
    def _():
        # Init to 0 (not finfo.min): sf >= 0 and every real voxel has >= 1
        # point, so the result is identical and dummy/pad voxels stay at 0.
        vmax_ref[...] = jnp.zeros_like(vmax_ref)

    c = vmax_ref.shape[1]
    x32 = _build_x32(pe_ref[...], sg_ref[...])
    y = jnp.dot(x32, w_ref[...], preferred_element_type=jnp.float32)
    sf = jnp.maximum(y[:, :c], 0.0) * jnp.maximum(y[:, c:], 0.0)  # (tn, C)
    _segment_max_update(vmax_ref, ids_ref[...], sf, vlo_ref[t], vhi_ref[t])


def avfe_voxelmax(vlo, vhi, ids_col, pe_s, sg_s, w_cat, v_pad, tn=TN):
    n_pad = pe_s.shape[0]
    c = w_cat.shape[1] // 2
    return pl.pallas_call(
        _avfe_voxelmax_kernel,
        out_shape=jax.ShapeDtypeStruct((v_pad, c), jnp.float32),
        grid_spec=pltpu.PrefetchScalarGridSpec(
            num_scalar_prefetch=2,
            grid=(n_pad // tn,),
            in_specs=[
                pl.BlockSpec((tn, 1), lambda t, lo, hi: (t, 0)),
                pl.BlockSpec((tn, 8), lambda t, lo, hi: (t, 0)),
                pl.BlockSpec((tn, 8), lambda t, lo, hi: (t, 0)),
                pl.BlockSpec((_KX, 2 * c), lambda t, lo, hi: (0, 0)),
            ],
            out_specs=pl.BlockSpec((v_pad, c), lambda t, lo, hi: (0, 0)),
        ),
        compiler_params=_acc_params(),
    )(vlo, vhi, ids_col, pe_s, sg_s, w_cat)


# ----------------------------------------------------------------------------
# Kernel 3 (AVFE): recompute scatter_feature and pack it with the (already
# XLA-gathered) per-point voxel max into one lane-dense (tn, 128) f32 block.
# Runs in the original point order.
# ----------------------------------------------------------------------------
def _avfe_pack_kernel(pe_ref, sg_ref, pvf_ref, w_ref, out_ref):
    c = pvf_ref.shape[1]
    x32 = _build_x32(pe_ref[...], sg_ref[...])
    y = jnp.dot(x32, w_ref[...], preferred_element_type=jnp.float32)
    sf = jnp.maximum(y[:, :c], 0.0) * jnp.maximum(y[:, c:], 0.0)
    out_ref[...] = jnp.concatenate([sf, pvf_ref[...]], axis=1)


def avfe_pack(pe, sg, pvf, w_cat, tn=TN):
    n_pad = pe.shape[0]
    c = pvf.shape[1]
    return pl.pallas_call(
        _avfe_pack_kernel,
        out_shape=jax.ShapeDtypeStruct((n_pad, 2 * c), jnp.float32),
        grid=(n_pad // tn,),
        in_specs=[pl.BlockSpec((tn, 8), lambda t: (t, 0)),
                  pl.BlockSpec((tn, 8), lambda t: (t, 0)),
                  pl.BlockSpec((tn, c), lambda t: (t, 0)),
                  pl.BlockSpec((_KX, 2 * c), lambda t: (0, 0))],
        out_specs=pl.BlockSpec((tn, 2 * c), lambda t: (t, 0)),
        compiler_params=_par_params(),
    )(pe, sg, pvf, w_cat)


# ----------------------------------------------------------------------------
# Kernel 4 (AVFEO): dual Linear + ReLU*ReLU + bounded per-voxel max, no
# per-point gather (the PyTorch output path only consumes voxel features).
# Runs on voxel-id-sorted points.
# ----------------------------------------------------------------------------
def _avfeo_voxelmax_kernel(vlo_ref, vhi_ref, ids_ref, fa_ref, pe_ref, sg_ref,
                           w1_ref, w2_ref, vmax_ref):
    t = pl.program_id(0)

    @pl.when(t == 0)
    def _():
        vmax_ref[...] = jnp.zeros_like(vmax_ref)

    x32 = _build_x32(pe_ref[...], sg_ref[...])
    y1 = jnp.dot(fa_ref[...], w1_ref[...], preferred_element_type=jnp.float32)
    y2 = jnp.dot(x32, w2_ref[...], preferred_element_type=jnp.float32)
    sf = jnp.maximum(y1, 0.0) * jnp.maximum(y2, 0.0)             # (tn, 128)
    _segment_max_update(vmax_ref, ids_ref[...], sf, vlo_ref[t], vhi_ref[t])


def avfeo_voxelmax(vlo, vhi, ids_col, fa_s, pe_s, sg_s, w1, w2_pad, v_pad,
                   tn=TN):
    n_pad = pe_s.shape[0]
    k1 = fa_s.shape[1]
    c = w1.shape[1]
    return pl.pallas_call(
        _avfeo_voxelmax_kernel,
        out_shape=jax.ShapeDtypeStruct((v_pad, c), jnp.float32),
        grid_spec=pltpu.PrefetchScalarGridSpec(
            num_scalar_prefetch=2,
            grid=(n_pad // tn,),
            in_specs=[
                pl.BlockSpec((tn, 1), lambda t, lo, hi: (t, 0)),
                pl.BlockSpec((tn, k1), lambda t, lo, hi: (t, 0)),
                pl.BlockSpec((tn, 8), lambda t, lo, hi: (t, 0)),
                pl.BlockSpec((tn, 8), lambda t, lo, hi: (t, 0)),
                pl.BlockSpec((k1, c), lambda t, lo, hi: (0, 0)),
                pl.BlockSpec((_KX, c), lambda t, lo, hi: (0, 0)),
            ],
            out_specs=pl.BlockSpec((v_pad, c), lambda t, lo, hi: (0, 0)),
        ),
        compiler_params=_acc_params(),
    )(vlo, vhi, ids_col, fa_s, pe_s, sg_s, w1, w2_pad)


# ----------------------------------------------------------------------------
# HVFeatureNetPaper forward (use_norm=False -> BatchNorm is identity)
# ----------------------------------------------------------------------------
def hv_feature_net_paper_forward(params, input_dict, bev_sizes, bev_range,
                                 input_scale_nums=3, AVFEO_feature_dim=128,
                                 tn=TN):
    batch_size = input_dict["batch_size"]
    points = input_dict["bev_points"].astype(jnp.float32)        # (N, 4)
    pvs = input_dict["bev_mapping_pvs"]                          # list of (N,) int32
    vfs = input_dict["bev_mapping_vfs"]                          # list of (V_i, 3) [b, y, x]
    n = points.shape[0]
    n_pad = _round_up(n, tn)
    n_tiles = n_pad // tn
    x_min, x_max, y_min, y_max = bev_range[0], bev_range[1], bev_range[2], bev_range[3]

    pts4 = jnp.pad(points, ((0, n_pad - n), (0, 0)))              # (N_pad, 4) f32

    avfe_dim = params["avfe_point_w"].shape[1]
    # Block-diagonal AVFE weight: rows [point9 | attn18 | pad], cols [point | attn].
    w_avfe = jnp.zeros((_KX, 2 * avfe_dim), jnp.float32)
    w_avfe = w_avfe.at[0:9, :avfe_dim].set(params["avfe_point_w"].astype(jnp.float32))
    w_avfe = w_avfe.at[9:27, avfe_dim:].set(params["avfe_attn_w"].astype(jnp.float32))

    avfeo_dim = params["avfeo_point_w"].shape[1]
    w_avfeo_point = params["avfeo_point_w"].astype(jnp.float32)   # (384, 128)
    w_avfeo_attn = jnp.zeros((_KX, avfeo_dim), jnp.float32)
    w_avfeo_attn = w_avfeo_attn.at[9:27, :].set(params["avfeo_attn_w"].astype(jnp.float32))

    def prep_scale(i):
        pv = pvs[i].astype(jnp.int32)
        vf = vfs[i]
        v_real = vf.shape[0]
        v_pad = _round_up(v_real + 1, 128)
        # Padded points -> dummy voxel (id = v_real): never pollutes real voxels.
        pv_pad = jnp.concatenate([pv, jnp.full((n_pad - n,), v_real, jnp.int32)])

        h, w = bev_sizes[i]
        vsx = (x_max - x_min) / w
        vsy = (y_max - y_min) / h
        safe = jnp.minimum(pv_pad, v_real - 1)
        vc = jnp.take(vf, safe, axis=0).astype(jnp.float32)       # (N_pad, 3)
        pvc_y = vc[:, 1:2] * vsy + y_min + vsy * 0.5
        pvc_x = vc[:, 2:3] * vsx + x_min + vsx * 0.5
        # One lane-packed per-point input block: [x y z i 1 pvc_x pvc_y 0].
        pe = jnp.concatenate(
            [pts4, jnp.ones((n_pad, 1), jnp.float32), pvc_x, pvc_y,
             jnp.zeros((n_pad, 1), jnp.float32)], axis=1)         # (N_pad, 8) f32

        ids_row = pv_pad.reshape(1, n_pad)
        stats = voxel_stats(ids_row, pe, v_pad, tn)               # (V_pad, 8) f32
        # Direct f32 gather of voxel stats back to points (review opt #4,
        # keeps the mean path exact in f32).
        sg = jnp.take(stats, pv_pad, axis=0)                      # (N_pad, 8) f32

        # Sort points by voxel id; per-tile voxel ranges go to SMEM via scalar
        # prefetch so the segment-max loop is bounded (review opt #1).
        perm = jnp.argsort(pv_pad)
        ids_sorted = jnp.take(pv_pad, perm)
        tiles = ids_sorted.reshape(n_tiles, tn)
        vlo = tiles[:, 0].astype(jnp.int32)
        vhi = (tiles[:, -1] + 1).astype(jnp.int32)
        return dict(pv_pad=pv_pad, v_real=v_real, v_pad=v_pad, vf=vf,
                    pe=pe, sg=sg, perm=perm,
                    ids_sorted_col=ids_sorted.reshape(n_pad, 1),
                    vlo=vlo, vhi=vhi)

    # ---------------- AVFE (input scales) ----------------
    avfe_feats = []
    for i in range(input_scale_nums):
        d = prep_scale(i)
        pe_s = jnp.take(d["pe"], d["perm"], axis=0)
        sg_s = jnp.take(d["sg"], d["perm"], axis=0)
        vmax = avfe_voxelmax(d["vlo"], d["vhi"], d["ids_sorted_col"],
                             pe_s, sg_s, w_avfe, d["v_pad"], tn)   # (V_pad, 64)
        pvf = jnp.take(vmax, d["pv_pad"], axis=0)                  # (N_pad, 64) f32
        packed = avfe_pack(d["pe"], d["sg"], pvf, w_avfe, tn)      # (N_pad, 128)
        avfe_feats.append(packed)

    final_avfe = jnp.concatenate(avfe_feats, axis=1)               # (N_pad, 384) f32

    # ---------------- AVFEO (output scales) ----------------
    outputs = []
    for i in range(input_scale_nums, len(bev_sizes)):
        d = prep_scale(i)
        pe_s = jnp.take(d["pe"], d["perm"], axis=0)
        sg_s = jnp.take(d["sg"], d["perm"], axis=0)
        fa_s = jnp.take(final_avfe, d["perm"], axis=0)
        vmax = avfeo_voxelmax(d["vlo"], d["vhi"], d["ids_sorted_col"],
                              fa_s, pe_s, sg_s, w_avfeo_point,
                              w_avfeo_attn, d["v_pad"], tn)        # (V_pad, 128)
        voxel_feature = vmax[:d["v_real"]]

        # dense(): scatter into the BEV canvas, then channels_first.
        # TODO(synk): data-dependent scatter_nd kept in plain JAX/XLA.
        h, w = bev_sizes[i]
        vf = d["vf"]
        canvas = jnp.zeros((batch_size, h, w, AVFEO_feature_dim), jnp.float32)
        canvas = canvas.at[vf[:, 0], vf[:, 1], vf[:, 2]].set(voxel_feature)
        outputs.append(jnp.transpose(canvas, (0, 3, 1, 2)))        # (B, 128, H, W)
    return outputs


# ----------------------------------------------------------------------------
# main
# ----------------------------------------------------------------------------
if __name__ == "__main__":
    key = jax.random.PRNGKey(0)
    batch_size = 2
    n_points = 1000                                  # padded to 1024 inside forward
    point_feature_dim = 9
    input_scale_nums = 3
    avfe_dim = 64
    avfeo_dim = 128
    bev_sizes = [[8, 8], [4, 4], [2, 2], [16, 16]]   # 3 input scales + 1 output scale
    bev_range = [0.0, 40.0, -20.0, 20.0]             # [x_min, x_max, y_min, y_max]

    k_pts, k_zi, k_b, kw1, kw2, kw3, kw4 = jax.random.split(key, 7)
    xy = jax.random.uniform(k_pts, (n_points, 2), jnp.float32)
    px = xy[:, 0] * (bev_range[1] - bev_range[0]) + bev_range[0]
    py = xy[:, 1] * (bev_range[3] - bev_range[2]) + bev_range[2]
    zi = jax.random.uniform(k_zi, (n_points, 2), jnp.float32)
    points = jnp.stack([px, py, zi[:, 0] * 2.0 - 1.0, zi[:, 1]], axis=1)   # (N, 4)
    batch_idx = jax.random.randint(k_b, (n_points,), 0, batch_size)

    # Build the point->voxel / voxel->BEV mappings (host-side data prep).
    points_np = np.asarray(points)
    batch_np = np.asarray(batch_idx)
    pvs, vfs = [], []
    for (h, w) in bev_sizes:
        vsx = (bev_range[1] - bev_range[0]) / w
        vsy = (bev_range[3] - bev_range[2]) / h
        xi = np.clip(((points_np[:, 0] - bev_range[0]) / vsx).astype(np.int64), 0, w - 1)
        yi = np.clip(((points_np[:, 1] - bev_range[2]) / vsy).astype(np.int64), 0, h - 1)
        keys = np.stack([batch_np, yi, xi], axis=1)
        uniq, inv = np.unique(keys, axis=0, return_inverse=True)
        vfs.append(jnp.asarray(uniq, jnp.int32))
        pvs.append(jnp.asarray(inv.reshape(-1), jnp.int32))

    # Deterministic synthetic Linear weights (no bias), stored as (in, out).
    def linear_w(k, fan_in, fan_out):
        bound = 1.0 / math.sqrt(fan_in)
        return jax.random.uniform(k, (fan_in, fan_out), jnp.float32, -bound, bound)

    params = {
        "avfe_point_w": linear_w(kw1, point_feature_dim, avfe_dim),
        "avfe_attn_w": linear_w(kw2, point_feature_dim * 2, avfe_dim),
        "avfeo_point_w": linear_w(kw3, input_scale_nums * 2 * avfe_dim, avfeo_dim),
        "avfeo_attn_w": linear_w(kw4, point_feature_dim * 2, avfeo_dim),
    }

    input_dict = {
        "batch_size": batch_size,
        "bev_points": points,
        "bev_mapping_pvs": pvs,
        "bev_mapping_vfs": vfs,
    }

    outs = hv_feature_net_paper_forward(params, input_dict, bev_sizes, bev_range,
                                        input_scale_nums=input_scale_nums,
                                        AVFEO_feature_dim=avfeo_dim)
    for o in outs:
        jax.block_until_ready(o)
    assert outs[0].shape == (batch_size, avfeo_dim, bev_sizes[3][0], bev_sizes[3][1])
    assert bool(jnp.isfinite(outs[0]).all())
    print("KERNEL_OK")
</pallas_src>

<mosaic_0001>
module attributes {stable_mosaic.version = 11 : i64} {
  func.func @_voxel_stats_kernel(%arg0: i32, %arg1: memref<1x1024xi32, #tpu.memory_space<vmem>>, %arg2: memref<1024x8xf32, #tpu.memory_space<vmem>>, %arg3: memref<256x8xf32, #tpu.memory_space<vmem>>) attributes {dimension_semantics = [#tpu.dimension_semantics<arbitrary>], iteration_bounds = array<i64: 1>, scalar_prefetch = 0 : i64, scratch_operands = 0 : i64, tpu.core_type = #tpu.core_type<tc>, window_params = [{transform_indices = @transform_0, window_bounds = array<i64: 1, 1024>}, {transform_indices = @transform_1, window_bounds = array<i64: 1024, 8>}, {pipeline_mode = #tpu.pipeline_mode<synchronous>, transform_indices = @transform_2, window_bounds = array<i64: 256, 8>}]} {
    %c0_i32 = arith.constant 0 : i32
    %0 = arith.cmpi eq, %arg0, %c0_i32 : i32
    %1 = arith.extui %0 : i1 to i32
    %c0_i32_0 = arith.constant 0 : i32
    %2 = arith.cmpi ne, %1, %c0_i32_0 : i32
    scf.if %2 {
      %cst_8 = arith.constant 0.000000e+00 : f32
      %14 = vector.broadcast %cst_8 : f32 to vector<256x8xf32>
      %c0_9 = arith.constant 0 : index
      %c0_10 = arith.constant 0 : index
      %15 = vector.load %arg3[%c0_9, %c0_10] : memref<256x8xf32, #tpu.memory_space<vmem>>, vector<256x8xf32>
      tpu.vector_store %arg3[%c0_9, %c0_10], %14 {strides = array<i32>} : memref<256x8xf32, #tpu.memory_space<vmem>>, vector<256x8xf32>,
    } else {
    }
    %3 = tpu.iota {dimensions = array<i32: 0>} : vector<256x1024xi32>
    %c0 = arith.constant 0 : index
    %c0_1 = arith.constant 0 : index
    %4 = vector.load %arg1[%c0, %c0_1] : memref<1x1024xi32, #tpu.memory_space<vmem>>, vector<1x1024xi32>
    %5 = vector.broadcast %4 : vector<1x1024xi32> to vector<256x1024xi32>
    %6 = arith.cmpi eq, %5, %3 : vector<256x1024xi32>
    %7 = arith.extui %6 : vector<256x1024xi1> to vector<256x1024xi32>
    %8 = arith.sitofp %7 : vector<256x1024xi32> to vector<256x1024xf32>
    %c0_2 = arith.constant 0 : index
    %c0_3 = arith.constant 0 : index
    %9 = vector.load %arg3[%c0_2, %c0_3] : memref<256x8xf32, #tpu.memory_space<vmem>>, vector<256x8xf32>
    %c0_4 = arith.constant 0 : index
    %c0_5 = arith.constant 0 : index
    %10 = vector.load %arg2[%c0_4, %c0_5] : memref<1024x8xf32, #tpu.memory_space<vmem>>, vector<1024x8xf32>
    %cst = arith.constant dense<0.000000e+00> : vector<256x8xf32>
    %11 = tpu.matmul %8, %10, %cst {dimension_numbers = #tpu.dot_dimension_numbers<[1], [0], [0], [1], [0, 0, 1, 1], [], []>} : vector<256x1024xf32>, vector<1024x8xf32>, vector<256x8xf32> -> vector<256x8xf32>
    %12 = arith.addf %9, %11 : vector<256x8xf32>
    %c0_6 = arith.constant 0 : index
    %c0_7 = arith.constant 0 : index
    %13 = vector.load %arg3[%c0_6, %c0_7] : memref<256x8xf32, #tpu.memory_space<vmem>>, vector<256x8xf32>
    tpu.vector_store %arg3[%c0_6, %c0_7], %12 {strides = array<i32>} : memref<256x8xf32, #tpu.memory_space<vmem>>, vector<256x8xf32>,
    return
  }
  func.func @transform_0(%arg0: i32) -> (i32, i32) {
    %c0_i32 = arith.constant 0 : i32
    %c0_i32_0 = arith.constant 0 : i32
    return %c0_i32, %arg0 : i32, i32
  }
  func.func @transform_1(%arg0: i32) -> (i32, i32) {
    %c0_i32 = arith.constant 0 : i32
    %c0_i32_0 = arith.constant 0 : i32
    return %arg0, %c0_i32 : i32, i32
  }
  func.func @transform_2(%arg0: i32) -> (i32, i32) {
    %c0_i32 = arith.constant 0 : i32
    %c0_i32_0 = arith.constant 0 : i32
    %c0_i32_1 = arith.constant 0 : i32
    return %c0_i32, %c0_i32_0 : i32, i32
  }
}

</mosaic_0001>

<llo_original>
// kernel: tpu_custom_call.1
$region0: #{tpu_custom_call.1}
  #allocation0 [shape = 'u32[]', space=smem, size = 0x4, offset = 0x4, fixed_abs, tag = 'smem constant byte address 0x4 - core index']
  #allocation1 [shape = 'u32[144,128]{1,0:T(1,128)}', space=vmem, size = 0x12000, scoped, tag = 'internal scratch']
  %s0 = inlined_call_operand.vmem [shape: s32[1,1024], index: 0, kind: input, shape index: {}]
  %s1 = inlined_call_operand.vmem [shape: f32[1024,8], index: 1, kind: input, shape index: {}]
  %s2 = inlined_call_operand.vmem [shape: f32[256,8], index: 2, kind: output, shape index: {}]
  %s3 = sld [smem:[#allocation0]]
  $region22: #{tpu_custom_call.1} parent=0
    _
  %s5 = ssub.s32 1, %s3
  %s6 = scalar_select 0, %s5, %s3
  // Predicated region
  $region2: #{tpu_custom_call.1} parent=0 // pred_check
    _
  $region3: #{tpu_custom_call.1} parent=0 // pred_check_branch
    %8 = sbr.rel (0) target = $region5
  $region4: #{tpu_custom_call.1} parent=0 // pred_region
    _
  $region5: #{tpu_custom_call.1} parent=0 // pred_fallthru
    _
  // Predicated region
  $region6: #{tpu_custom_call.1} parent=0 // pred_check
    _
  $region7: #{tpu_custom_call.1} parent=0 // pred_check_branch
    %10 = sbr.rel (0) target = $region9
  $region8: #{tpu_custom_call.1} parent=0 // pred_region
    _
  $region9: #{tpu_custom_call.1} parent=0 // pred_fallthru
    _
  %p11 = scmp.eq.s32.totalorder 0, 0
  // Predicated region
  $region10: #{tpu_custom_call.1} parent=0 // pred_check
    %p12 = pneg %p11
  $region11: #{tpu_custom_call.1} parent=0 // pred_check_branch
    %14 = sbr.rel (%p12) target = $region13
  $region12: #{tpu_custom_call.1} parent=0 // pred_region
    %vm15 = vcmask 64512
    %16 = vst.msk [vmem:[%s2] sm:$0xff] %vm15, 0.0
    %17 = vst.msk [vmem:[%s2 + $0x8] sm:$0xff] %vm15, 0.0
    %18 = vst.msk [vmem:[%s2 + $0x10] sm:$0xff] %vm15, 0.0
    %19 = vst.msk [vmem:[%s2 + $0x18] sm:$0xff] %vm15, 0.0
    %20 = vst.msk [vmem:[%s2 + $0x20] sm:$0xff] %vm15, 0.0
    %21 = vst.msk [vmem:[%s2 + $0x28] sm:$0xff] %vm15, 0.0
    %22 = vst.msk [vmem:[%s2 + $0x30] sm:$0xff] %vm15, 0.0
    %23 = vst.msk [vmem:[%s2 + $0x38] sm:$0xff] %vm15, 0.0
    %24 = vst.msk [vmem:[%s2 + $0x40] sm:$0xff] %vm15, 0.0
    %25 = vst.msk [vmem:[%s2 + $0x48] sm:$0xff] %vm15, 0.0
    %26 = vst.msk [vmem:[%s2 + $0x50] sm:$0xff] %vm15, 0.0
    %27 = vst.msk [vmem:[%s2 + $0x58] sm:$0xff] %vm15, 0.0
    %28 = vst.msk [vmem:[%s2 + $0x60] sm:$0xff] %vm15, 0.0
    %29 = vst.msk [vmem:[%s2 + $0x68] sm:$0xff] %vm15, 0.0
    %30 = vst.msk [vmem:[%s2 + $0x70] sm:$0xff] %vm15, 0.0
    %31 = vst.msk [vmem:[%s2 + $0x78] sm:$0xff] %vm15, 0.0
    %32 = vst.msk [vmem:[%s2 + $0x80] sm:$0xff] %vm15, 0.0
    %33 = vst.msk [vmem:[%s2 + $0x88] sm:$0xff] %vm15, 0.0
    %34 = vst.msk [vmem:[%s2 + $0x90] sm:$0xff] %vm15, 0.0
    %35 = vst.msk [vmem:[%s2 + $0x98] sm:$0xff] %vm15, 0.0
    %36 = vst.msk [vmem:[%s2 + $0xa0] sm:$0xff] %vm15, 0.0
    %37 = vst.msk [vmem:[%s2 + $0xa8] sm:$0xff] %vm15, 0.0
    %38 = vst.msk [vmem:[%s2 + $0xb0] sm:$0xff] %vm15, 0.0
    %39 = vst.msk [vmem:[%s2 + $0xb8] sm:$0xff] %vm15, 0.0
    %40 = vst.msk [vmem:[%s2 + $0xc0] sm:$0xff] %vm15, 0.0
    %41 = vst.msk [vmem:[%s2 + $0xc8] sm:$0xff] %vm15, 0.0
    %42 = vst.msk [vmem:[%s2 + $0xd0] sm:$0xff] %vm15, 0.0
    %43 = vst.msk [vmem:[%s2 + $0xd8] sm:$0xff] %vm15, 0.0
    %44 = vst.msk [vmem:[%s2 + $0xe0] sm:$0xff] %vm15, 0.0
    %45 = vst.msk [vmem:[%s2 + $0xe8] sm:$0xff] %vm15, 0.0
    %46 = vst.msk [vmem:[%s2 + $0xf0] sm:$0xff] %vm15, 0.0
    %47 = vst.msk [vmem:[%s2 + $0xf8] sm:$0xff] %vm15, 0.0
  $region13: #{tpu_custom_call.1} parent=0 // pred_fallthru
    _
  %v48 = vlaneseq
  %v49 = vshrl.u32 %v48, 7
  %v50 = vadd.s32 %v49, 8
  %v51 = vadd.s32 %v49, 16
  %v52 = vadd.s32 %v49, 24
  %v53 = vadd.s32 %v49, 32
  %v54 = vadd.s32 %v49, 40
  %v55 = vadd.s32 %v49, 48
  %v56 = vadd.s32 %v49, 56
  %v57 = vadd.s32 %v49, 64
  %v58 = vadd.s32 %v49, 72
  %v59 = vadd.s32 %v49, 80
  %v60 = vadd.s32 %v49, 88
  %v61 = vadd.s32 %v49, 96
  %v62 = vadd.s32 %v49, 104
  %v63 = vadd.s32 %v49, 112
  %v64 = vadd.s32 %v49, 120
  %v65 = vadd.s32 %v49, 128
  %v66 = vadd.s32 %v49, 136
  %v67 = vadd.s32 %v49, 144
  %v68 = vadd.s32 %v49, 152
  %v69 = vadd.s32 %v49, 160
  %v70 = vadd.s32 %v49, 168
  %v71 = vadd.s32 %v49, 176
  %v72 = vadd.s32 %v49, 184
  %v73 = vadd.s32 %v49, 192
  %v74 = vadd.s32 %v49, 200
  %v75 = vadd.s32 %v49, 208
  %v76 = vadd.s32 %v49, 216
  %v77 = vadd.s32 %v49, 224
  %v78 = vadd.s32 %v49, 232
  %v79 = vadd.s32 %v49, 240
  %v80 = vadd.s32 %v49, 248
  %v81 = vld [vmem:[%s0] sm:$0xff]
  %v82 = vlaneseq
  %v83 = vshrl.u32 %v82, 7
  %v84 = vsub.s32 0, %v83
  %v85 = vrot.slane %v81, %v84
  %v86 = vlaneseq
  %v87 = vshrl.u32 %v86, 7
  %v88 = vsub.s32 1, %v87
  %v89 = vrot.slane %v81, %v88
  %v90 = vlaneseq
  %v91 = vshrl.u32 %v90, 7
  %v92 = vsub.s32 2, %v91
  %v93 = vrot.slane %v81, %v92
  %v94 = vlaneseq
  %v95 = vshrl.u32 %v94, 7
  %v96 = vsub.s32 3, %v95
  %v97 = vrot.slane %v81, %v96
  %v98 = vlaneseq
  %v99 = vshrl.u32 %v98, 7
  %v100 = vsub.s32 4, %v99
  %v101 = vrot.slane %v81, %v100
  %v102 = vlaneseq
  %v103 = vshrl.u32 %v102, 7
  %v104 = vsub.s32 5, %v103
  %v105 = vrot.slane %v81, %v104
  %v106 = vlaneseq
  %v107 = vshrl.u32 %v106, 7
  %v108 = vsub.s32 6, %v107
  %v109 = vrot.slane %v81, %v108
  %v110 = vlaneseq
  %v111 = vshrl.u32 %v110, 7
  %v112 = vsub.s32 7, %v111
  %v113 = vrot.slane %v81, %v112
  %vm114 = vcmp.eq.s32.totalorder %v85, %v49
  %vm115 = vcmp.eq.s32.totalorder %v89, %v49
  %vm116 = vcmp.eq.s32.totalorder %v93, %v49
  %vm117 = vcmp.eq.s32.totalorder %v97, %v49
  %vm118 = vcmp.eq.s32.totalorder %v101, %v49
  %vm119 = vcmp.eq.s32.totalorder %v105, %v49
  %vm120 = vcmp.eq.s32.totalorder %v109, %v49
  %vm121 = vcmp.eq.s32.totalorder %v113, %v49
  %vm122 = vcmp.eq.s32.totalorder %v85, %v50
  %vm123 = vcmp.eq.s32.totalorder %v89, %v50
  %vm124 = vcmp.eq.s32.totalorder %v93, %v50
  %vm125 = vcmp.eq.s32.totalorder %v97, %v50
  %vm126 = vcmp.eq.s32.totalorder %v101, %v50
  %vm127 = vcmp.eq.s32.totalorder %v105, %v50
  %vm128 = vcmp.eq.s32.totalorder %v109, %v50
  %vm129 = vcmp.eq.s32.totalorder %v113, %v50
  %vm130 = vcmp.eq.s32.totalorder %v85, %v51
  %vm131 = vcmp.eq.s32.totalorder %v89, %v51
  %vm132 = vcmp.eq.s32.totalorder %v93, %v51
  %vm133 = vcmp.eq.s32.totalorder %v97, %v51
  %vm134 = vcmp.eq.s32.totalorder %v101, %v51
  %vm135 = vcmp.eq.s32.totalorder %v105, %v51
  %vm136 = vcmp.eq.s32.totalorder %v109, %v51
  %vm137 = vcmp.eq.s32.totalorder %v113, %v51
  %vm138 = vcmp.eq.s32.totalorder %v85, %v52
  %vm139 = vcmp.eq.s32.totalorder %v89, %v52
  %vm140 = vcmp.eq.s32.totalorder %v93, %v52
  %vm141 = vcmp.eq.s32.totalorder %v97, %v52
  %vm142 = vcmp.eq.s32.totalorder %v101, %v52
  %vm143 = vcmp.eq.s32.totalorder %v105, %v52
  %vm144 = vcmp.eq.s32.totalorder %v109, %v52
  %vm145 = vcmp.eq.s32.totalorder %v113, %v52
  %vm146 = vcmp.eq.s32.totalorder %v85, %v53
  %vm147 = vcmp.eq.s32.totalorder %v89, %v53
  %vm148 = vcmp.eq.s32.totalorder %v93, %v53
  %vm149 = vcmp.eq.s32.totalorder %v97, %v53
  %vm150 = vcmp.eq.s32.totalorder %v101, %v53
  %vm151 = vcmp.eq.s32.totalorder %v105, %v53
  %vm152 = vcmp.eq.s32.totalorder %v109, %v53
  %vm153 = vcmp.eq.s32.totalorder %v113, %v53
  %vm154 = vcmp.eq.s32.totalorder %v85, %v54
  %vm155 = vcmp.eq.s32.totalorder %v89, %v54
  %vm156 = vcmp.eq.s32.totalorder %v93, %v54
  %vm157 = vcmp.eq.s32.totalorder %v97, %v54
  %vm158 = vcmp.eq.s32.totalorder %v101, %v54
  %vm159 = vcmp.eq.s32.totalorder %v105, %v54
  %vm160 = vcmp.eq.s32.totalorder %v109, %v54
  %vm161 = vcmp.eq.s32.totalorder %v113, %v54
  %vm162 = vcmp.eq.s32.totalorder %v85, %v55
  %vm163 = vcmp.eq.s32.totalorder %v89, %v55
  %vm164 = vcmp.eq.s32.totalorder %v93, %v55
  %vm165 = vcmp.eq.s32.totalorder %v97, %v55
  %vm166 = vcmp.eq.s32.totalorder %v101, %v55
  %vm167 = vcmp.eq.s32.totalorder %v105, %v55
  %vm168 = vcmp.eq.s32.totalorder %v109, %v55
  %vm169 = vcmp.eq.s32.totalorder %v113, %v55
  %vm170 = vcmp.eq.s32.totalorder %v85, %v56
  %vm171 = vcmp.eq.s32.totalorder %v89, %v56
  %vm172 = vcmp.eq.s32.totalorder %v93, %v56
  %vm173 = vcmp.eq.s32.totalorder %v97, %v56
  %vm174 = vcmp.eq.s32.totalorder %v101, %v56
  %vm175 = vcmp.eq.s32.totalorder %v105, %v56
  %vm176 = vcmp.eq.s32.totalorder %v109, %v56
  %vm177 = vcmp.eq.s32.totalorder %v113, %v56
  %vm178 = vcmp.eq.s32.totalorder %v85, %v57
  %vm179 = vcmp.eq.s32.totalorder %v89, %v57
  %vm180 = vcmp.eq.s32.totalorder %v93, %v57
  %vm181 = vcmp.eq.s32.totalorder %v97, %v57
  %vm182 = vcmp.eq.s32.totalorder %v101, %v57
  %vm183 = vcmp.eq.s32.totalorder %v105, %v57
  %vm184 = vcmp.eq.s32.totalorder %v109, %v57
  %vm185 = vcmp.eq.s32.totalorder %v113, %v57
  %vm186 = vcmp.eq.s32.totalorder %v85, %v58
  %vm187 = vcmp.eq.s32.totalorder %v89, %v58
  %vm188 = vcmp.eq.s32.totalorder %v93, %v58
  %vm189 = vcmp.eq.s32.totalorder %v97, %v58
  %vm190 = vcmp.eq.s32.totalorder %v101, %v58
  %vm191 = vcmp.eq.s32.totalorder %v105, %v58
  %vm192 = vcmp.eq.s32.totalorder %v109, %v58
  %vm193 = vcmp.eq.s32.totalorder %v113, %v58
  %vm194 = vcmp.eq.s32.totalorder %v85, %v59
  %vm195 = vcmp.eq.s32.totalorder %v89, %v59
  %vm196 = vcmp.eq.s32.totalorder %v93, %v59
  %vm197 = vcmp.eq.s32.totalorder %v97, %v59
  %vm198 = vcmp.eq.s32.totalorder %v101, %v59
  %vm199 = vcmp.eq.s32.totalorder %v105, %v59
  %vm200 = vcmp.eq.s32.totalorder %v109, %v59
  %vm201 = vcmp.eq.s32.totalorder %v113, %v59
  %vm202 = vcmp.eq.s32.totalorder %v85, %v60
  %vm203 = vcmp.eq.s32.totalorder %v89, %v60
  %vm204 = vcmp.eq.s32.totalorder %v93, %v60
  %vm205 = vcmp.eq.s32.totalorder %v97, %v60
  %vm206 = vcmp.eq.s32.totalorder %v101, %v60
  %vm207 = vcmp.eq.s32.totalorder %v105, %v60
  %vm208 = vcmp.eq.s32.totalorder %v109, %v60
  %vm209 = vcmp.eq.s32.totalorder %v113, %v60
  %vm210 = vcmp.eq.s32.totalorder %v85, %v61
  %vm211 = vcmp.eq.s32.totalorder %v89, %v61
  %vm212 = vcmp.eq.s32.totalorder %v93, %v61
  %vm213 = vcmp.eq.s32.totalorder %v97, %v61
  %vm214 = vcmp.eq.s32.totalorder %v101, %v61
  %vm215 = vcmp.eq.s32.totalorder %v105, %v61
  %vm216 = vcmp.eq.s32.totalorder %v109, %v61
  %vm217 = vcmp.eq.s32.totalorder %v113, %v61
  %vm218 = vcmp.eq.s32.totalorder %v85, %v62
  %vm219 = vcmp.eq.s32.totalorder %v89, %v62
  %vm220 = vcmp.eq.s32.totalorder %v93, %v62
  %vm221 = vcmp.eq.s32.totalorder %v97, %v62
  %vm222 = vcmp.eq.s32.totalorder %v101, %v62
  %vm223 = vcmp.eq.s32.totalorder %v105, %v62
  %vm224 = vcmp.eq.s32.totalorder %v109, %v62
  %vm225 = vcmp.eq.s32.totalorder %v113, %v62
  %vm226 = vcmp.eq.s32.totalorder %v85, %v63
  %vm227 = vcmp.eq.s32.totalorder %v89, %v63
  %vm228 = vcmp.eq.s32.totalorder %v93, %v63
  %vm229 = vcmp.eq.s32.totalorder %v97, %v63
  %vm230 = vcmp.eq.s32.totalorder %v101, %v63
  %vm231 = vcmp.eq.s32.totalorder %v105, %v63
  %vm232 = vcmp.eq.s32.totalorder %v109, %v63
  %vm233 = vcmp.eq.s32.totalorder %v113, %v63
  %vm234 = vcmp.eq.s32.totalorder %v85, %v64
  %vm235 = vcmp.eq.s32.totalorder %v89, %v64
  %vm236 = vcmp.eq.s32.totalorder %v93, %v64
  %vm237 = vcmp.eq.s32.totalorder %v97, %v64
  %vm238 = vcmp.eq.s32.totalorder %v101, %v64
  %vm239 = vcmp.eq.s32.totalorder %v105, %v64
  %vm240 = vcmp.eq.s32.totalorder %v109, %v64
  %vm241 = vcmp.eq.s32.totalorder %v113, %v64
  %vm242 = vcmp.eq.s32.totalorder %v85, %v65
  %vm243 = vcmp.eq.s32.totalorder %v89, %v65
  %vm244 = vcmp.eq.s32.totalorder %v93, %v65
  %vm245 = vcmp.eq.s32.totalorder %v97, %v65
  %vm246 = vcmp.eq.s32.totalorder %v101, %v65
  %vm247 = vcmp.eq.s32.totalorder %v105, %v65
  %vm248 = vcmp.eq.s32.totalorder %v109, %v65
  %vm249 = vcmp.eq.s32.totalorder %v113, %v65
  %vm250 = vcmp.eq.s32.totalorder %v85, %v66
  %vm251 = vcmp.eq.s32.totalorder %v89, %v66
  %vm252 = vcmp.eq.s32.totalorder %v93, %v66
  %vm253 = vcmp.eq.s32.totalorder %v97, %v66
  %vm254 = vcmp.eq.s32.totalorder %v101, %v66
  %vm255 = vcmp.eq.s32.totalorder %v105, %v66
  %vm256 = vcmp.eq.s32.totalorder %v109, %v66
  %vm257 = vcmp.eq.s32.totalorder %v113, %v66
  %vm258 = vcmp.eq.s32.totalorder %v85, %v67
  %vm259 = vcmp.eq.s32.totalorder %v89, %v67
  %vm260 = vcmp.eq.s32.totalorder %v93, %v67
  %vm261 = vcmp.eq.s32.totalorder %v97, %v67
  %vm262 = vcmp.eq.s32.totalorder %v101, %v67
  %vm263 = vcmp.eq.s32.totalorder %v105, %v67
  %vm264 = vcmp.eq.s32.totalorder %v109, %v67
  %vm265 = vcmp.eq.s32.totalorder %v113, %v67
  %vm266 = vcmp.eq.s32.totalorder %v85, %v68
  %vm267 = vcmp.eq.s32.totalorder %v89, %v68
  %vm268 = vcmp.eq.s32.totalorder %v93, %v68
  %vm269 = vcmp.eq.s32.totalorder %v97, %v68
  %vm270 = vcmp.eq.s32.totalorder %v101, %v68
  %vm271 = vcmp.eq.s32.totalorder %v105, %v68
  %vm272 = vcmp.eq.s32.totalorder %v109, %v68
  %vm273 = vcmp.eq.s32.totalorder %v113, %v68
  %vm274 = vcmp.eq.s32.totalorder %v85, %v69
  %vm275 = vcmp.eq.s32.totalorder %v89, %v69
  %vm276 = vcmp.eq.s32.totalorder %v93, %v69
  %vm277 = vcmp.eq.s32.totalorder %v97, %v69
  %vm278 = vcmp.eq.s32.totalorder %v101, %v69
  %vm279 = vcmp.eq.s32.totalorder %v105, %v69
  %vm280 = vcmp.eq.s32.totalorder %v109, %v69
  %vm281 = vcmp.eq.s32.totalorder %v113, %v69
  %vm282 = vcmp.eq.s32.totalorder %v85, %v70
  %vm283 = vcmp.eq.s32.totalorder %v89, %v70
  %vm284 = vcmp.eq.s32.totalorder %v93, %v70
  %vm285 = vcmp.eq.s32.totalorder %v97, %v70
  %vm286 = vcmp.eq.s32.totalorder %v101, %v70
  %vm287 = vcmp.eq.s32.totalorder %v105, %v70
  %vm288 = vcmp.eq.s32.totalorder %v109, %v70
  %vm289 = vcmp.eq.s32.totalorder %v113, %v70
  %vm290 = vcmp.eq.s32.totalorder %v85, %v71
  %vm291 = vcmp.eq.s32.totalorder %v89, %v71
  %vm292 = vcmp.eq.s32.totalorder %v93, %v71
  %vm293 = vcmp.eq.s32.totalorder %v97, %v71
  %vm294 = vcmp.eq.s32.totalorder %v101, %v71
  %vm295 = vcmp.eq.s32.totalorder %v105, %v71
  %vm296 = vcmp.eq.s32.totalorder %v109, %v71
  %vm297 = vcmp.eq.s32.totalorder %v113, %v71
  %vm298 = vcmp.eq.s32.totalorder %v85, %v72
  %vm299 = vcmp.eq.s32.totalorder %v89, %v72
  %vm300 = vcmp.eq.s32.totalorder %v93, %v72
  %vm301 = vcmp.eq.s32.totalorder %v97, %v72
  %vm302 = vcmp.eq.s32.totalorder %v101, %v72
  %vm303 = vcmp.eq.s32.totalorder %v105, %v72
  %vm304 = vcmp.eq.s32.totalorder %v109, %v72
  %vm305 = vcmp.eq.s32.totalorder %v113, %v72
  %vm306 = vcmp.eq.s32.totalorder %v85, %v73
  %vm307 = vcmp.eq.s32.totalorder %v89, %v73
  %vm308 = vcmp.eq.s32.totalorder %v93, %v73
  %vm309 = vcmp.eq.s32.totalorder %v97, %v73
  %vm310 = vcmp.eq.s32.totalorder %v101, %v73
  %vm311 = vcmp.eq.s32.totalorder %v105, %v73
  %vm312 = vcmp.eq.s32.totalorder %v109, %v73
  %vm313 = vcmp.eq.s32.totalorder %v113, %v73
  %vm314 = vcmp.eq.s32.totalorder %v85, %v74
  %vm315 = vcmp.eq.s32.totalorder %v89, %v74
  %vm316 = vcmp.eq.s32.totalorder %v93, %v74
  %vm317 = vcmp.eq.s32.totalorder %v97, %v74
  %vm318 = vcmp.eq.s32.totalorder %v101, %v74
  %vm319 = vcmp.eq.s32.totalorder %v105, %v74
  %vm320 = vcmp.eq.s32.totalorder %v109, %v74
  %vm321 = vcmp.eq.s32.totalorder %v113, %v74
  %vm322 = vcmp.eq.s32.totalorder %v85, %v75
  %vm323 = vcmp.eq.s32.totalorder %v89, %v75
  %vm324 = vcmp.eq.s32.totalorder %v93, %v75
  %vm325 = vcmp.eq.s32.totalorder %v97, %v75
  %vm326 = vcmp.eq.s32.totalorder %v101, %v75
  %vm327 = vcmp.eq.s32.totalorder %v105, %v75
  %vm328 = vcmp.eq.s32.totalorder %v109, %v75
  %vm329 = vcmp.eq.s32.totalorder %v113, %v75
  %vm330 = vcmp.eq.s32.totalorder %v85, %v76
  %vm331 = vcmp.eq.s32.totalorder %v89, %v76
  %vm332 = vcmp.eq.s32.totalorder %v93, %v76
  %vm333 = vcmp.eq.s32.totalorder %v97, %v76
  %vm334 = vcmp.eq.s32.totalorder %v101, %v76
  %vm335 = vcmp.eq.s32.totalorder %v105, %v76
  %vm336 = vcmp.eq.s32.totalorder %v109, %v76
  %vm337 = vcmp.eq.s32.totalorder %v113, %v76
  %vm338 = vcmp.eq.s32.totalorder %v85, %v77
  %vm339 = vcmp.eq.s32.totalorder %v89, %v77
  %vm340 = vcmp.eq.s32.totalorder %v93, %v77
  %vm341 = vcmp.eq.s32.totalorder %v97, %v77
  %vm342 = vcmp.eq.s32.totalorder %v101, %v77
  %vm343 = vcmp.eq.s32.totalorder %v105, %v77
  %vm344 = vcmp.eq.s32.totalorder %v109, %v77
  %vm345 = vcmp.eq.s32.totalorder %v113, %v77
  %vm346 = vcmp.eq.s32.totalorder %v85, %v78
  %vm347 = vcmp.eq.s32.totalorder %v89, %v78
  %vm348 = vcmp.eq.s32.totalorder %v93, %v78
  %vm349 = vcmp.eq.s32.totalorder %v97, %v78
  %vm350 = vcmp.eq.s32.totalorder %v101, %v78
  %vm351 = vcmp.eq.s32.totalorder %v105, %v78
  %vm352 = vcmp.eq.s32.totalorder %v109, %v78
  %vm353 = vcmp.eq.s32.totalorder %v113, %v78
  %vm354 = vcmp.eq.s32.totalorder %v85, %v79
  %vm355 = vcmp.eq.s32.totalorder %v89, %v79
  %vm356 = vcmp.eq.s32.totalorder %v93, %v79
  %vm357 = vcmp.eq.s32.totalorder %v97, %v79
  %vm358 = vcmp.eq.s32.totalorder %v101, %v79
  %vm359 = vcmp.eq.s32.totalorder %v105, %v79
  %vm360 = vcmp.eq.s32.totalorder %v109, %v79
  %vm361 = vcmp.eq.s32.totalorder %v113, %v79
  %vm362 = vcmp.eq.s32.totalorder %v85, %v80
  %vm363 = vcmp.eq.s32.totalorder %v89, %v80
  %vm364 = vcmp.eq.s32.totalorder %v93, %v80
  %vm365 = vcmp.eq.s32.totalorder %v97, %v80
  %vm366 = vcmp.eq.s32.totalorder %v101, %v80
  %vm367 = vcmp.eq.s32.totalorder %v105, %v80
  %vm368 = vcmp.eq.s32.totalorder %v109, %v80
  %vm369 = vcmp.eq.s32.totalorder %v113, %v80
  %v370 = vsel %vm114, 1, 0
  %v371 = vsel %vm115, 1, 0
  %v372 = vsel %vm116, 1, 0
  %v373 = vsel %vm117, 1, 0
  %v374 = vsel %vm118, 1, 0
  %v375 = vsel %vm119, 1, 0
  %v376 = vsel %vm120, 1, 0
  %v377 = vsel %vm121, 1, 0
  %v378 = vsel %vm122, 1, 0
  %v379 = vsel %vm123, 1, 0
  %v380 = vsel %vm124, 1, 0
  %v381 = vsel %vm125, 1, 0
  %v382 = vsel %vm126, 1, 0
  %v383 = vsel %vm127, 1, 0
  %v384 = vsel %vm128, 1, 0
  %v385 = vsel %vm129, 1, 0
  %v386 = vsel %vm130, 1, 0
  %v387 = vsel %vm131, 1, 0
  %v388 = vsel %vm132, 1, 0
  %v389 = vsel %vm133, 1, 0
  %v390 = vsel %vm134, 1, 0
  %v391 = vsel %vm135, 1, 0
  %v392 = vsel %vm136, 1, 0
  %v393 = vsel %vm137, 1, 0
  %v394 = vsel %vm138, 1, 0
  %v395 = vsel %vm139, 1, 0
  %v396 = vsel %vm140, 1, 0
  %v397 = vsel %vm141, 1, 0
  %v398 = vsel %vm142, 1, 0
  %v399 = vsel %vm143, 1, 0
  %v400 = vsel %vm144, 1, 0
  %v401 = vsel %vm145, 1, 0
  %v402 = vsel %vm146, 1, 0
  %v403 = vsel %vm147, 1, 0
  %v404 = vsel %vm148, 1, 0
  %v405 = vsel %vm149, 1, 0
  %v406 = vsel %vm150, 1, 0
  %v407 = vsel %vm151, 1, 0
  %v408 = vsel %vm152, 1, 0
  %v409 = vsel %vm153, 1, 0
  %v410 = vsel %vm154, 1, 0
  %v411 = vsel %vm155, 1, 0
  %v412 = vsel %vm156, 1, 0
  %v413 = vsel %vm157, 1, 0
  %v414 = vsel %vm158, 1, 0
  %v415 = vsel %vm159, 1, 0
  %v416 = vsel %vm160, 1, 0
  %v417 = vsel %vm161, 1, 0
  %v418 = vsel %vm162, 1, 0
  %v419 = vsel %vm163, 1, 0
  %v420 = vsel %vm164, 1, 0
  %v421 = vsel %vm165, 1, 0
  %v422 = vsel %vm166, 1, 0
  %v423 = vsel %vm167, 1, 0
  %v424 = vsel %vm168, 1, 0
  %v425 = vsel %vm169, 1, 0
  %v426 = vsel %vm170, 1, 0
  %v427 = vsel %vm171, 1, 0
  %v428 = vsel %vm172, 1, 0
  %v429 = vsel %vm173, 1, 0
  %v430 = vsel %vm174, 1, 0
  %v431 = vsel %vm175, 1, 0
  %v432 = vsel %vm176, 1, 0
  %v433 = vsel %vm177, 1, 0
  %v434 = vsel %vm178, 1, 0
  %v435 = vsel %vm179, 1, 0
  %v436 = vsel %vm180, 1, 0
  %v437 = vsel %vm181, 1, 0
  %v438 = vsel %vm182, 1, 0
  %v439 = vsel %vm183, 1, 0
  %v440 = vsel %vm184, 1, 0
  %v441 = vsel %vm185, 1, 0
  %v442 = vsel %vm186, 1, 0
  %v443 = vsel %vm187, 1, 0
  %v444 = vsel %vm188, 1, 0
  %v445 = vsel %vm189, 1, 0
  %v446 = vsel %vm190, 1, 0
  %v447 = vsel %vm191, 1, 0
  %v448 = vsel %vm192, 1, 0
  %v449 = vsel %vm193, 1, 0
  %v450 = vsel %vm194, 1, 0
  %v451 = vsel %vm195, 1, 0
  %v452 = vsel %vm196, 1, 0
  %v453 = vsel %vm197, 1, 0
  %v454 = vsel %vm198, 1, 0
  %v455 = vsel %vm199, 1, 0
  %v456 = vsel %vm200, 1, 0
  %v457 = vsel %vm201, 1, 0
  %v458 = vsel %vm202, 1, 0
  %v459 = vsel %vm203, 1, 0
  %v460 = vsel %vm204, 1, 0
  %v461 = vsel %vm205, 1, 0
  %v462 = vsel %vm206, 1, 0
  %v463 = vsel %vm207, 1, 0
  %v464 = vsel %vm208, 1, 0
  %v465 = vsel %vm209, 1, 0
  %v466 = vsel %vm210, 1, 0
  %v467 = vsel %vm211, 1, 0
  %v468 = vsel %vm212, 1, 0
  %v469 = vsel %vm213, 1, 0
  %v470 = vsel %vm214, 1, 0
  %v471 = vsel %vm215, 1, 0
  %v472 = vsel %vm216, 1, 0
  %v473 = vsel %vm217, 1, 0
  %v474 = vsel %vm218, 1, 0
  %v475 = vsel %vm219, 1, 0
  %v476 = vsel %vm220, 1, 0
  %v477 = vsel %vm221, 1, 0
  %v478 = vsel %vm222, 1, 0
  %v479 = vsel %vm223, 1, 0
  %v480 = vsel %vm224, 1, 0
  %v481 = vsel %vm225, 1, 0
  %v482 = vsel %vm226, 1, 0
  %v483 = vsel %vm227, 1, 0
  %v484 = vsel %vm228, 1, 0
  %v485 = vsel %vm229, 1, 0
  %v486 = vsel %vm230, 1, 0
  %v487 = vsel %vm231, 1, 0
  %v488 = vsel %vm232, 1, 0
  %v489 = vsel %vm233, 1, 0
  %v490 = vsel %vm234, 1, 0
  %v491 = vsel %vm235, 1, 0
  %v492 = vsel %vm236, 1, 0
  %v493 = vsel %vm237, 1, 0
  %v494 = vsel %vm238, 1, 0
  %v495 = vsel %vm239, 1, 0
  %v496 = vsel %vm240, 1, 0
  %v497 = vsel %vm241, 1, 0
  %v498 = vsel %vm242, 1, 0
  %v499 = vsel %vm243, 1, 0
  %v500 = vsel %vm244, 1, 0
  %v501 = vsel %vm245, 1, 0
  %v502 = vsel %vm246, 1, 0
  %v503 = vsel %vm247, 1, 0
  %v504 = vsel %vm248, 1, 0
  %v505 = vsel %vm249, 1, 0
  %v506 = vsel %vm250, 1, 0
  %v507 = vsel %vm251, 1, 0
  %v508 = vsel %vm252, 1, 0
  %v509 = vsel %vm253, 1, 0
  %v510 = vsel %vm254, 1, 0
  %v511 = vsel %vm255, 1, 0
  %v512 = vsel %vm256, 1, 0
  %v513 = vsel %vm257, 1, 0
  %v514 = vsel %vm258, 1, 0
  %v515 = vsel %vm259, 1, 0
  %v516 = vsel %vm260, 1, 0
  %v517 = vsel %vm261, 1, 0
  %v518 = vsel %vm262, 1, 0
  %v519 = vsel %vm263, 1, 0
  %v520 = vsel %vm264, 1, 0
  %v521 = vsel %vm265, 1, 0
  %v522 = vsel %vm266, 1, 0
  %v523 = vsel %vm267, 1, 0
  %v524 = vsel %vm268, 1, 0
  %v525 = vsel %vm269, 1, 0
  %v526 = vsel %vm270, 1, 0
  %v527 = vsel %vm271, 1, 0
  %v528 = vsel %vm272, 1, 0
  %v529 = vsel %vm273, 1, 0
  %v530 = vsel %vm274, 1, 0
  %v531 = vsel %vm275, 1, 0
  %v532 = vsel %vm276, 1, 0
  %v533 = vsel %vm277, 1, 0
  %v534 = vsel %vm278, 1, 0
  %v535 = vsel %vm279, 1, 0
  %v536 = vsel %vm280, 1, 0
  %v537 = vsel %vm281, 1, 0
  %v538 = vsel %vm282, 1, 0
  %v539 = vsel %vm283, 1, 0
  %v540 = vsel %vm284, 1, 0
  %v541 = vsel %vm285, 1, 0
  %v542 = vsel %vm286, 1, 0
  %v543 = vsel %vm287, 1, 0
  %v544 = vsel %vm288, 1, 0
  %v545 = vsel %vm289, 1, 0
  %v546 = vsel %vm290, 1, 0
  %v547 = vsel %vm291, 1, 0
  %v548 = vsel %vm292, 1, 0
  %v549 = vsel %vm293, 1, 0
  %v550 = vsel %vm294, 1, 0
  %v551 = vsel %vm295, 1, 0
  %v552 = vsel %vm296, 1, 0
  %v553 = vsel %vm297, 1, 0
  %v554 = vsel %vm298, 1, 0
  %v555 = vsel %vm299, 1, 0
  %v556 = vsel %vm300, 1, 0
  %v557 = vsel %vm301, 1, 0
  %v558 = vsel %vm302, 1, 0
  %v559 = vsel %vm303, 1, 0
  %v560 = vsel %vm304, 1, 0
  %v561 = vsel %vm305, 1, 0
  %v562 = vsel %vm306, 1, 0
  %v563 = vsel %vm307, 1, 0
  %v564 = vsel %vm308, 1, 0
  %v565 = vsel %vm309, 1, 0
  %v566 = vsel %vm310, 1, 0
  %v567 = vsel %vm311, 1, 0
  %v568 = vsel %vm312, 1, 0
  %v569 = vsel %vm313, 1, 0
  %v570 = vsel %vm314, 1, 0
  %v571 = vsel %vm315, 1, 0
  %v572 = vsel %vm316, 1, 0
  %v573 = vsel %vm317, 1, 0
  %v574 = vsel %vm318, 1, 0
  %v575 = vsel %vm319, 1, 0
  %v576 = vsel %vm320, 1, 0
  %v577 = vsel %vm321, 1, 0
  %v578 = vsel %vm322, 1, 0
  %v579 = vsel %vm323, 1, 0
  %v580 = vsel %vm324, 1, 0
  %v581 = vsel %vm325, 1, 0
  %v582 = vsel %vm326, 1, 0
  %v583 = vsel %vm327, 1, 0
  %v584 = vsel %vm328, 1, 0
  %v585 = vsel %vm329, 1, 0
  %v586 = vsel %vm330, 1, 0
  %v587 = vsel %vm331, 1, 0
  %v588 = vsel %vm332, 1, 0
  %v589 = vsel %vm333, 1, 0
  %v590 = vsel %vm334, 1, 0
  %v591 = vsel %vm335, 1, 0
  %v592 = vsel %vm336, 1, 0
  %v593 = vsel %vm337, 1, 0
  %v594 = vsel %vm338, 1, 0
  %v595 = vsel %vm339, 1, 0
  %v596 = vsel %vm340, 1, 0
  %v597 = vsel %vm341, 1, 0
  %v598 = vsel %vm342, 1, 0
  %v599 = vsel %vm343, 1, 0
  %v600 = vsel %vm344, 1, 0
  %v601 = vsel %vm345, 1, 0
  %v602 = vsel %vm346, 1, 0
  %v603 = vsel %vm347, 1, 0
  %v604 = vsel %vm348, 1, 0
  %v605 = vsel %vm349, 1, 0
  %v606 = vsel %vm350, 1, 0
  %v607 = vsel %vm351, 1, 0
  %v608 = vsel %vm352, 1, 0
  %v609 = vsel %vm353, 1, 0
  %v610 = vsel %vm354, 1, 0
  %v611 = vsel %vm355, 1, 0
  %v612 = vsel %vm356, 1, 0
  %v613 = vsel %vm357, 1, 0
  %v614 = vsel %vm358, 1, 0
  %v615 = vsel %vm359, 1, 0
  %v616 = vsel %vm360, 1, 0
  %v617 = vsel %vm361, 1, 0
  %v618 = vsel %vm362, 1, 0
  %v619 = vsel %vm363, 1, 0
  %v620 = vsel %vm364, 1, 0
  %v621 = vsel %vm365, 1, 0
  %v622 = vsel %vm366, 1, 0
  %v623 = vsel %vm367, 1, 0
  %v624 = vsel %vm368, 1, 0
  %v625 = vsel %vm369, 1, 0
  %v626 = vcvt.s32.f32 %v370
  %v627 = vcvt.s32.f32 %v371
  %v628 = vcvt.s32.f32 %v372
  %v629 = vcvt.s32.f32 %v373
  %v630 = vcvt.s32.f32 %v374
  %v631 = vcvt.s32.f32 %v375
  %v632 = vcvt.s32.f32 %v376
  %v633 = vcvt.s32.f32 %v377
  %v634 = vcvt.s32.f32 %v378
  %v635 = vcvt.s32.f32 %v379
  %v636 = vcvt.s32.f32 %v380
  %v637 = vcvt.s32.f32 %v381
  %v638 = vcvt.s32.f32 %v382
  %v639 = vcvt.s32.f32 %v383
  %v640 = vcvt.s32.f32 %v384
  %v641 = vcvt.s32.f32 %v385
  %v642 = vcvt.s32.f32 %v386
  %v643 = vcvt.s32.f32 %v387
  %v644 = vcvt.s32.f32 %v388
  %v645 = vcvt.s32.f32 %v389
  %v646 = vcvt.s32.f32 %v390
  %v647 = vcvt.s32.f32 %v391
  %v648 = vcvt.s32.f32 %v392
  %v649 = vcvt.s32.f32 %v393
  %v650 = vcvt.s32.f32 %v394
  %v651 = vcvt.s32.f32 %v395
  %v652 = vcvt.s32.f32 %v396
  %v653 = vcvt.s32.f32 %v397
  %v654 = vcvt.s32.f32 %v398
  %v655 = vcvt.s32.f32 %v399
  %v656 = vcvt.s32.f32 %v400
  %v657 = vcvt.s32.f32 %v401
  %v658 = vcvt.s32.f32 %v402
  %v659 = vcvt.s32.f32 %v403
  %v660 = vcvt.s32.f32 %v404
  %v661 = vcvt.s32.f32 %v405
  %v662 = vcvt.s32.f32 %v406
  %v663 = vcvt.s32.f32 %v407
  %v664 = vcvt.s32.f32 %v408
  %v665 = vcvt.s32.f32 %v409
  %v666 = vcvt.s32.f32 %v410
  %v667 = vcvt.s32.f32 %v411
  %v668 = vcvt.s32.f32 %v412
  %v669 = vcvt.s32.f32 %v413
  %v670 = vcvt.s32.f32 %v414
  %v671 = vcvt.s32.f32 %v415
  %v672 = vcvt.s32.f32 %v416
  %v673 = vcvt.s32.f32 %v417
  %v674 = vcvt.s32.f32 %v418
  %v675 = vcvt.s32.f32 %v419
  %v676 = vcvt.s32.f32 %v420
  %v677 = vcvt.s32.f32 %v421
  %v678 = vcvt.s32.f32 %v422
  %v679 = vcvt.s32.f32 %v423
  %v680 = vcvt.s32.f32 %v424
  %v681 = vcvt.s32.f32 %v425
  %v682 = vcvt.s32.f32 %v426
  %v683 = vcvt.s32.f32 %v427
  %v684 = vcvt.s32.f32 %v428
  %v685 = vcvt.s32.f32 %v429
  %v686 = vcvt.s32.f32 %v430
  %v687 = vcvt.s32.f32 %v431
  %v688 = vcvt.s32.f32 %v432
  %v689 = vcvt.s32.f32 %v433
  %v690 = vcvt.s32.f32 %v434
  %v691 = vcvt.s32.f32 %v435
  %v692 = vcvt.s32.f32 %v436
  %v693 = vcvt.s32.f32 %v437
  %v694 = vcvt.s32.f32 %v438
  %v695 = vcvt.s32.f32 %v439
  %v696 = vcvt.s32.f32 %v440
  %v697 = vcvt.s32.f32 %v441
  %v698 = vcvt.s32.f32 %v442
  %v699 = vcvt.s32.f32 %v443
  %v700 = vcvt.s32.f32 %v444
  %v701 = vcvt.s32.f32 %v445
  %v702 = vcvt.s32.f32 %v446
  %v703 = vcvt.s32.f32 %v447
  %v704 = vcvt.s32.f32 %v448
  %v705 = vcvt.s32.f32 %v449
  %v706 = vcvt.s32.f32 %v450
  %v707 = vcvt.s32.f32 %v451
  %v708 = vcvt.s32.f32 %v452
  %v709 = vcvt.s32.f32 %v453
  %v710 = vcvt.s32.f32 %v454
  %v711 = vcvt.s32.f32 %v455
  %v712 = vcvt.s32.f32 %v456
  %v713 = vcvt.s32.f32 %v457
  %v714 = vcvt.s32.f32 %v458
  %v715 = vcvt.s32.f32 %v459
  %v716 = vcvt.s32.f32 %v460
  %v717 = vcvt.s32.f32 %v461
  %v718 = vcvt.s32.f32 %v462
  %v719 = vcvt.s32.f32 %v463
  %v720 = vcvt.s32.f32 %v464
  %v721 = vcvt.s32.f32 %v465
  %v722 = vcvt.s32.f32 %v466
  %v723 = vcvt.s32.f32 %v467
  %v724 = vcvt.s32.f32 %v468
  %v725 = vcvt.s32.f32 %v469
  %v726 = vcvt.s32.f32 %v470
  %v727 = vcvt.s32.f32 %v471
  %v728 = vcvt.s32.f32 %v472
  %v729 = vcvt.s32.f32 %v473
  %v730 = vcvt.s32.f32 %v474
  %v731 = vcvt.s32.f32 %v475
  %v732 = vcvt.s32.f32 %v476
  %v733 = vcvt.s32.f32 %v477
  %v734 = vcvt.s32.f32 %v478
  %v735 = vcvt.s32.f32 %v479
  %v736 = vcvt.s32.f32 %v480
  %v737 = vcvt.s32.f32 %v481
  %v738 = vcvt.s32.f32 %v482
  %v739 = vcvt.s32.f32 %v483
  %v740 = vcvt.s32.f32 %v484
  %v741 = vcvt.s32.f32 %v485
  %v742 = vcvt.s32.f32 %v486
  %v743 = vcvt.s32.f32 %v487
  %v744 = vcvt.s32.f32 %v488
  %v745 = vcvt.s32.f32 %v489
  %v746 = vcvt.s32.f32 %v490
  %v747 = vcvt.s32.f32 %v491
  %v748 = vcvt.s32.f32 %v492
  %v749 = vcvt.s32.f32 %v493
  %v750 = vcvt.s32.f32 %v494
  %v751 = vcvt.s32.f32 %v495
  %v752 = vcvt.s32.f32 %v496
  %v753 = vcvt.s32.f32 %v497
  %v754 = vcvt.s32.f32 %v498
  %v755 = vcvt.s32.f32 %v499
  %v756 = vcvt.s32.f32 %v500
  %v757 = vcvt.s32.f32 %v501
  %v758 = vcvt.s32.f32 %v502
  %v759 = vcvt.s32.f32 %v503
  %v760 = vcvt.s32.f32 %v504
  %v761 = vcvt.s32.f32 %v505
  %v762 = vcvt.s32.f32 %v506
  %v763 = vcvt.s32.f32 %v507
  %v764 = vcvt.s32.f32 %v508
  %v765 = vcvt.s32.f32 %v509
  %v766 = vcvt.s32.f32 %v510
  %v767 = vcvt.s32.f32 %v511
  %v768 = vcvt.s32.f32 %v512
  %v769 = vcvt.s32.f32 %v513
  %v770 = vcvt.s32.f32 %v514
  %v771 = vcvt.s32.f32 %v515
  %v772 = vcvt.s32.f32 %v516
  %v773 = vcvt.s32.f32 %v517
  %v774 = vcvt.s32.f32 %v518
  %v775 = vcvt.s32.f32 %v519
  %v776 = vcvt.s32.f32 %v520
  %v777 = vcvt.s32.f32 %v521
  %v778 = vcvt.s32.f32 %v522
  %v779 = vcvt.s32.f32 %v523
  %v780 = vcvt.s32.f32 %v524
  %v781 = vcvt.s32.f32 %v525
  %v782 = vcvt.s32.f32 %v526
  %v783 = vcvt.s32.f32 %v527
  %v784 = vcvt.s32.f32 %v528
  %v785 = vcvt.s32.f32 %v529
  %v786 = vcvt.s32.f32 %v530
  %v787 = vcvt.s32.f32 %v531
  %v788 = vcvt.s32.f32 %v532
  %v789 = vcvt.s32.f32 %v533
  %v790 = vcvt.s32.f32 %v534
  %v791 = vcvt.s32.f32 %v535
  %v792 = vcvt.s32.f32 %v536
  %v793 = vcvt.s32.f32 %v537
  %v794 = vcvt.s32.f32 %v538
  %v795 = vcvt.s32.f32 %v539
  %v796 = vcvt.s32.f32 %v540
  %v797 = vcvt.s32.f32 %v541
  %v798 = vcvt.s32.f32 %v542
  %v799 = vcvt.s32.f32 %v543
  %v800 = vcvt.s32.f32 %v544
  %v801 = vcvt.s32.f32 %v545
  %v802 = vcvt.s32.f32 %v546
  %v803 = vcvt.s32.f32 %v547
  %v804 = vcvt.s32.f32 %v548
  %v805 = vcvt.s32.f32 %v549
  %v806 = vcvt.s32.f32 %v550
  %v807 = vcvt.s32.f32 %v551
  %v808 = vcvt.s32.f32 %v552
  %v809 = vcvt.s32.f32 %v553
  %v810 = vcvt.s32.f32 %v554
  %v811 = vcvt.s32.f32 %v555
  %v812 = vcvt.s32.f32 %v556
  %v813 = vcvt.s32.f32 %v557
  %v814 = vcvt.s32.f32 %v558
  %v815 = vcvt.s32.f32 %v559
  %v816 = vcvt.s32.f32 %v560
  %v817 = vcvt.s32.f32 %v561
  %v818 = vcvt.s32.f32 %v562
  %v819 = vcvt.s32.f32 %v563
  %v820 = vcvt.s32.f32 %v564
  %v821 = vcvt.s32.f32 %v565
  %v822 = vcvt.s32.f32 %v566
  %v823 = vcvt.s32.f32 %v567
  %v824 = vcvt.s32.f32 %v568
  %v825 = vcvt.s32.f32 %v569
  %v826 = vcvt.s32.f32 %v570
  %v827 = vcvt.s32.f32 %v571
  %v828 = vcvt.s32.f32 %v572
  %v829 = vcvt.s32.f32 %v573
  %v830 = vcvt.s32.f32 %v574
  %v831 = vcvt.s32.f32 %v575
  %v832 = vcvt.s32.f32 %v576
  %v833 = vcvt.s32.f32 %v577
  %v834 = vcvt.s32.f32 %v578
  %v835 = vcvt.s32.f32 %v579
  %v836 = vcvt.s32.f32 %v580
  %v837 = vcvt.s32.f32 %v581
  %v838 = vcvt.s32.f32 %v582
  %v839 = vcvt.s32.f32 %v583
  %v840 = vcvt.s32.f32 %v584
  %v841 = vcvt.s32.f32 %v585
  %v842 = vcvt.s32.f32 %v586
  %v843 = vcvt.s32.f32 %v587
  %v844 = vcvt.s32.f32 %v588
  %v845 = vcvt.s32.f32 %v589
  %v846 = vcvt.s32.f32 %v590
  %v847 = vcvt.s32.f32 %v591
  %v848 = vcvt.s32.f32 %v592
  %v849 = vcvt.s32.f32 %v593
  %v850 = vcvt.s32.f32 %v594
  %v851 = vcvt.s32.f32 %v595
  %v852 = vcvt.s32.f32 %v596
  %v853 = vcvt.s32.f32 %v597
  %v854 = vcvt.s32.f32 %v598
  %v855 = vcvt.s32.f32 %v599
  %v856 = vcvt.s32.f32 %v600
  %v857 = vcvt.s32.f32 %v601
  %v858 = vcvt.s32.f32 %v602
  %v859 = vcvt.s32.f32 %v603
  %v860 = vcvt.s32.f32 %v604
  %v861 = vcvt.s32.f32 %v605
  %v862 = vcvt.s32.f32 %v606
  %v863 = vcvt.s32.f32 %v607
  %v864 = vcvt.s32.f32 %v608
  %v865 = vcvt.s32.f32 %v609
  %v866 = vcvt.s32.f32 %v610
  %v867 = vcvt.s32.f32 %v611
  %v868 = vcvt.s32.f32 %v612
  %v869 = vcvt.s32.f32 %v613
  %v870 = vcvt.s32.f32 %v614
  %v871 = vcvt.s32.f32 %v615
  %v872 = vcvt.s32.f32 %v616
  %v873 = vcvt.s32.f32 %v617
  %v874 = vcvt.s32.f32 %v618
  %v875 = vcvt.s32.f32 %v619
  %v876 = vcvt.s32.f32 %v620
  %v877 = vcvt.s32.f32 %v621
  %v878 = vcvt.s32.f32 %v622
  %v879 = vcvt.s32.f32 %v623
  %v880 = vcvt.s32.f32 %v624
  %v881 = vcvt.s32.f32 %v625
  %v882 = vld [vmem:[%s2] sm:$0xff]
  %v883 = vld [vmem:[%s2 + $0x8] sm:$0xff]
  %v884 = vld [vmem:[%s2 + $0x10] sm:$0xff]
  %v885 = vld [vmem:[%s2 + $0x18] sm:$0xff]
  %v886 = vld [vmem:[%s2 + $0x20] sm:$0xff]
  %v887 = vld [vmem:[%s2 + $0x28] sm:$0xff]
  %v888 = vld [vmem:[%s2 + $0x30] sm:$0xff]
  %v889 = vld [vmem:[%s2 + $0x38] sm:$0xff]
  %v890 = vld [vmem:[%s2 + $0x40] sm:$0xff]
  %v891 = vld [vmem:[%s2 + $0x48] sm:$0xff]
  %v892 = vld [vmem:[%s2 + $0x50] sm:$0xff]
  %v893 = vld [vmem:[%s2 + $0x58] sm:$0xff]
  %v894 = vld [vmem:[%s2 + $0x60] sm:$0xff]
  %v895 = vld [vmem:[%s2 + $0x68] sm:$0xff]
  %v896 = vld [vmem:[%s2 + $0x70] sm:$0xff]
  %v897 = vld [vmem:[%s2 + $0x78] sm:$0xff]
  %v898 = vld [vmem:[%s2 + $0x80] sm:$0xff]
  %v899 = vld [vmem:[%s2 + $0x88] sm:$0xff]
  %v900 = vld [vmem:[%s2 + $0x90] sm:$0xff]
  %v901 = vld [vmem:[%s2 + $0x98] sm:$0xff]
  %v902 = vld [vmem:[%s2 + $0xa0] sm:$0xff]
  %v903 = vld [vmem:[%s2 + $0xa8] sm:$0xff]
  %v904 = vld [vmem:[%s2 + $0xb0] sm:$0xff]
  %v905 = vld [vmem:[%s2 + $0xb8] sm:$0xff]
  %v906 = vld [vmem:[%s2 + $0xc0] sm:$0xff]
  %v907 = vld [vmem:[%s2 + $0xc8] sm:$0xff]
  %v908 = vld [vmem:[%s2 + $0xd0] sm:$0xff]
  %v909 = vld [vmem:[%s2 + $0xd8] sm:$0xff]
  %v910 = vld [vmem:[%s2 + $0xe0] sm:$0xff]
  %v911 = vld [vmem:[%s2 + $0xe8] sm:$0xff]
  %v912 = vld [vmem:[%s2 + $0xf0] sm:$0xff]
  %v913 = vld [vmem:[%s2 + $0xf8] sm:$0xff]
  %v914 = vld [vmem:[%s1] sm:$0xff]
  %v915 = vld [vmem:[%s1 + $0x8] sm:$0xff]
  %v916 = vld [vmem:[%s1 + $0x10] sm:$0xff]
  %v917 = vld [vmem:[%s1 + $0x18] sm:$0xff]
  %v918 = vld [vmem:[%s1 + $0x20] sm:$0xff]
  %v919 = vld [vmem:[%s1 + $0x28] sm:$0xff]
  %v920 = vld [vmem:[%s1 + $0x30] sm:$0xff]
  %v921 = vld [vmem:[%s1 + $0x38] sm:$0xff]
  %v922 = vld [vmem:[%s1 + $0x40] sm:$0xff]
  %v923 = vld [vmem:[%s1 + $0x48] sm:$0xff]
  %v924 = vld [vmem:[%s1 + $0x50] sm:$0xff]
  %v925 = vld [vmem:[%s1 + $0x58] sm:$0xff]
  %v926 = vld [vmem:[%s1 + $0x60] sm:$0xff]
  %v927 = vld [vmem:[%s1 + $0x68] sm:$0xff]
  %v928 = vld [vmem:[%s1 + $0x70] sm:$0xff]
  %v929 = vld [vmem:[%s1 + $0x78] sm:$0xff]
  %v930 = vld [vmem:[%s1 + $0x80] sm:$0xff]
  %v931 = vld [vmem:[%s1 + $0x88] sm:$0xff]
  %v932 = vld [vmem:[%s1 + $0x90] sm:$0xff]
  %v933 = vld [vmem:[%s1 + $0x98] sm:$0xff]
  %v934 = vld [vmem:[%s1 + $0xa0] sm:$0xff]
  %v935 = vld [vmem:[%s1 + $0xa8] sm:$0xff]
  %v936 = vld [vmem:[%s1 + $0xb0] sm:$0xff]
  %v937 = vld [vmem:[%s1 + $0xb8] sm:$0xff]
  %v938 = vld [vmem:[%s1 + $0xc0] sm:$0xff]
  %v939 = vld [vmem:[%s1 + $0xc8] sm:$0xff]
  %v940 = vld [vmem:[%s1 + $0xd0] sm:$0xff]
  %v941 = vld [vmem:[%s1 + $0xd8] sm:$0xff]
  %v942 = vld [vmem:[%s1 + $0xe0] sm:$0xff]
  %v943 = vld [vmem:[%s1 + $0xe8] sm:$0xff]
  %v944 = vld [vmem:[%s1 + $0xf0] sm:$0xff]
  %v945 = vld [vmem:[%s1 + $0xf8] sm:$0xff]
  %v946 = vld [vmem:[%s1 + $0x100] sm:$0xff]
  %v947 = vld [vmem:[%s1 + $0x108] sm:$0xff]
  %v948 = vld [vmem:[%s1 + $0x110] sm:$0xff]
  %v949 = vld [vmem:[%s1 + $0x118] sm:$0xff]
  %v950 = vld [vmem:[%s1 + $0x120] sm:$0xff]
  %v951 = vld [vmem:[%s1 + $0x128] sm:$0xff]
  %v952 = vld [vmem:[%s1 + $0x130] sm:$0xff]
  %v953 = vld [vmem:[%s1 + $0x138] sm:$0xff]
  %v954 = vld [vmem:[%s1 + $0x140] sm:$0xff]
  %v955 = vld [vmem:[%s1 + $0x148] sm:$0xff]
  %v956 = vld [vmem:[%s1 + $0x150] sm:$0xff]
  %v957 = vld [vmem:[%s1 + $0x158] sm:$0xff]
  %v958 = vld [vmem:[%s1 + $0x160] sm:$0xff]
  %v959 = vld [vmem:[%s1 + $0x168] sm:$0xff]
  %v960 = vld [vmem:[%s1 + $0x170] sm:$0xff]
  %v961 = vld [vmem:[%s1 + $0x178] sm:$0xff]
  %v962 = vld [vmem:[%s1 + $0x180] sm:$0xff]
  %v963 = vld [vmem:[%s1 + $0x188] sm:$0xff]
  %v964 = vld [vmem:[%s1 + $0x190] sm:$0xff]
  %v965 = vld [vmem:[%s1 + $0x198] sm:$0xff]
  %v966 = vld [vmem:[%s1 + $0x1a0] sm:$0xff]
  %v967 = vld [vmem:[%s1 + $0x1a8] sm:$0xff]
  %v968 = vld [vmem:[%s1 + $0x1b0] sm:$0xff]
  %v969 = vld [vmem:[%s1 + $0x1b8] sm:$0xff]
  %v970 = vld [vmem:[%s1 + $0x1c0] sm:$0xff]
  %v971 = vld [vmem:[%s1 + $0x1c8] sm:$0xff]
  %v972 = vld [vmem:[%s1 + $0x1d0] sm:$0xff]
  %v973 = vld [vmem:[%s1 + $0x1d8] sm:$0xff]
  %v974 = vld [vmem:[%s1 + $0x1e0] sm:$0xff]
  %v975 = vld [vmem:[%s1 + $0x1e8] sm:$0xff]
  %v976 = vld [vmem:[%s1 + $0x1f0] sm:$0xff]
  %v977 = vld [vmem:[%s1 + $0x1f8] sm:$0xff]
  %v978 = vld [vmem:[%s1 + $0x200] sm:$0xff]
  %v979 = vld [vmem:[%s1 + $0x208] sm:$0xff]
  %v980 = vld [vmem:[%s1 + $0x210] sm:$0xff]
  %v981 = vld [vmem:[%s1 + $0x218] sm:$0xff]
  %v982 = vld [vmem:[%s1 + $0x220] sm:$0xff]
  %v983 = vld [vmem:[%s1 + $0x228] sm:$0xff]
  %v984 = vld [vmem:[%s1 + $0x230] sm:$0xff]
  %v985 = vld [vmem:[%s1 + $0x238] sm:$0xff]
  %v986 = vld [vmem:[%s1 + $0x240] sm:$0xff]
  %v987 = vld [vmem:[%s1 + $0x248] sm:$0xff]
  %v988 = vld [vmem:[%s1 + $0x250] sm:$0xff]
  %v989 = vld [vmem:[%s1 + $0x258] sm:$0xff]
  %v990 = vld [vmem:[%s1 + $0x260] sm:$0xff]
  %v991 = vld [vmem:[%s1 + $0x268] sm:$0xff]
  %v992 = vld [vmem:[%s1 + $0x270] sm:$0xff]
  %v993 = vld [vmem:[%s1 + $0x278] sm:$0xff]
  %v994 = vld [vmem:[%s1 + $0x280] sm:$0xff]
  %v995 = vld [vmem:[%s1 + $0x288] sm:$0xff]
  %v996 = vld [vmem:[%s1 + $0x290] sm:$0xff]
  %v997 = vld [vmem:[%s1 + $0x298] sm:$0xff]
  %v998 = vld [vmem:[%s1 + $0x2a0] sm:$0xff]
  %v999 = vld [vmem:[%s1 + $0x2a8] sm:$0xff]
  %v1000 = vld [vmem:[%s1 + $0x2b0] sm:$0xff]
  %v1001 = vld [vmem:[%s1 + $0x2b8] sm:$0xff]
  %v1002 = vld [vmem:[%s1 + $0x2c0] sm:$0xff]
  %v1003 = vld [vmem:[%s1 + $0x2c8] sm:$0xff]
  %v1004 = vld [vmem:[%s1 + $0x2d0] sm:$0xff]
  %v1005 = vld [vmem:[%s1 + $0x2d8] sm:$0xff]
  %v1006 = vld [vmem:[%s1 + $0x2e0] sm:$0xff]
  %v1007 = vld [vmem:[%s1 + $0x2e8] sm:$0xff]
  %v1008 = vld [vmem:[%s1 + $0x2f0] sm:$0xff]
  %v1009 = vld [vmem:[%s1 + $0x2f8] sm:$0xff]
  %v1010 = vld [vmem:[%s1 + $0x300] sm:$0xff]
  %v1011 = vld [vmem:[%s1 + $0x308] sm:$0xff]
  %v1012 = vld [vmem:[%s1 + $0x310] sm:$0xff]
  %v1013 = vld [vmem:[%s1 + $0x318] sm:$0xff]
  %v1014 = vld [vmem:[%s1 + $0x320] sm:$0xff]
  %v1015 = vld [vmem:[%s1 + $0x328] sm:$0xff]
  %v1016 = vld [vmem:[%s1 + $0x330] sm:$0xff]
  %v1017 = vld [vmem:[%s1 + $0x338] sm:$0xff]
  %v1018 = vld [vmem:[%s1 + $0x340] sm:$0xff]
  %v1019 = vld [vmem:[%s1 + $0x348] sm:$0xff]
  %v1020 = vld [vmem:[%s1 + $0x350] sm:$0xff]
  %v1021 = vld [vmem:[%s1 + $0x358] sm:$0xff]
  %v1022 = vld [vmem:[%s1 + $0x360] sm:$0xff]
  %v1023 = vld [vmem:[%s1 + $0x368] sm:$0xff]
  %v1024 = vld [vmem:[%s1 + $0x370] sm:$0xff]
  %v1025 = vld [vmem:[%s1 + $0x378] sm:$0xff]
  %v1026 = vld [vmem:[%s1 + $0x380] sm:$0xff]
  %v1027 = vld [vmem:[%s1 + $0x388] sm:$0xff]
  %v1028 = vld [vmem:[%s1 + $0x390] sm:$0xff]
  %v1029 = vld [vmem:[%s1 + $0x398] sm:$0xff]
  %v1030 = vld [vmem:[%s1 + $0x3a0] sm:$0xff]
  %v1031 = vld [vmem:[%s1 + $0x3a8] sm:$0xff]
  %v1032 = vld [vmem:[%s1 + $0x3b0] sm:$0xff]
  %v1033 = vld [vmem:[%s1 + $0x3b8] sm:$0xff]
  %v1034 = vld [vmem:[%s1 + $0x3c0] sm:$0xff]
  %v1035 = vld [vmem:[%s1 + $0x3c8] sm:$0xff]
  %v1036 = vld [vmem:[%s1 + $0x3d0] sm:$0xff]
  %v1037 = vld [vmem:[%s1 + $0x3d8] sm:$0xff]
  %v1038 = vld [vmem:[%s1 + $0x3e0] sm:$0xff]
  %v1039 = vld [vmem:[%s1 + $0x3e8] sm:$0xff]
  %v1040 = vld [vmem:[%s1 + $0x3f0] sm:$0xff]
  %v1041 = vld [vmem:[%s1 + $0x3f8] sm:$0xff]
  %1042 = vmatprep.subr.mxu0 0.0
  %1043 = vmatpush1.msra.mxu0 %v929
  %1044 = vmatprep.subr.mxu0 0.0
  %1045 = vmatpush1.msra.mxu0 %v928
  %1046 = vmatprep.subr.mxu0 0.0
  %1047 = vmatpush1.msra.mxu0 %v927
  %1048 = vmatprep.subr.mxu0 0.0
  %1049 = vmatpush1.msra.mxu0 %v926
  %1050 = vmatprep.subr.mxu0 0.0
  %1051 = vmatpush1.msra.mxu0 %v925
  %1052 = vmatprep.subr.mxu0 0.0
  %1053 = vmatpush1.msra.mxu0 %v924
  %1054 = vmatprep.subr.mxu0 0.0
  %1055 = vmatpush1.msra.mxu0 %v923
  %1056 = vmatprep.subr.mxu0 0.0
  %1057 = vmatpush1.msra.mxu0 %v922
  %1058 = vmatprep.subr.mxu0 0.0
  %1059 = vmatpush1.msra.mxu0 %v921
  %1060 = vmatprep.subr.mxu0 0.0
  %1061 = vmatpush1.msra.mxu0 %v920
  %1062 = vmatprep.subr.mxu0 0.0
  %1063 = vmatpush1.msra.mxu0 %v919
  %1064 = vmatprep.subr.mxu0 0.0
  %1065 = vmatpush1.msra.mxu0 %v918
  %1066 = vmatprep.subr.mxu0 0.0
  %1067 = vmatpush1.msra.mxu0 %v917
  %1068 = vmatprep.subr.mxu0 0.0
  %1069 = vmatpush1.msra.mxu0 %v916
  %1070 = vmatprep.subr.mxu0 0.0
  %1071 = vmatpush1.msra.mxu0 %v915
  %1072 = vmatprep.subr.mxu0 0.0
  %1073 = vmatpush1.msra.mxu0 %v914
  %1074 = vmatprep.subr.mxu0 0.0
  %1075 = vmatpush2.msra.mxu0 %v945
  %1076 = vmatprep.subr.mxu0 0.0
  %1077 = vmatpush2.msra.mxu0 %v944
  %1078 = vmatprep.subr.mxu0 0.0
  %1079 = vmatpush2.msra.mxu0 %v943
  %1080 = vmatprep.subr.mxu0 0.0
  %1081 = vmatpush2.msra.mxu0 %v942
  %1082 = vmatprep.subr.mxu0 0.0
  %1083 = vmatpush2.msra.mxu0 %v941
  %1084 = vmatprep.subr.mxu0 0.0
  %1085 = vmatpush2.msra.mxu0 %v940
  %1086 = vmatprep.subr.mxu0 0.0
  %1087 = vmatpush2.msra.mxu0 %v939
  %1088 = vmatprep.subr.mxu0 0.0
  %1089 = vmatpush2.msra.mxu0 %v938
  %1090 = vmatprep.subr.mxu0 0.0
  %1091 = vmatpush2.msra.mxu0 %v937
  %1092 = vmatprep.subr.mxu0 0.0
  %1093 = vmatpush2.msra.mxu0 %v936
  %1094 = vmatprep.subr.mxu0 0.0
  %1095 = vmatpush2.msra.mxu0 %v935
  %1096 = vmatprep.subr.mxu0 0.0
  %1097 = vmatpush2.msra.mxu0 %v934
  %1098 = vmatprep.subr.mxu0 0.0
  %1099 = vmatpush2.msra.mxu0 %v933
  %1100 = vmatprep.subr.mxu0 0.0
  %1101 = vmatpush2.msra.mxu0 %v932
  %1102 = vmatprep.subr.mxu0 0.0
  %1103 = vmatpush2.msra.mxu0 %v931
  %1104 = vmatprep.subr.mxu0 0.0
  %1105 = vmatpush2.msra.mxu0 %v930
  %1106 = vmatprep.mubr.f32.mxu0 %v627
  %1107 = vmatmul.mubr.f32.gmra.mxu0 %v626
  %v1108 = vpop.f32.mrf.mxu0
  %v1109 = vadd.f32 0.0, %v1108
  %v1110 = vpop.f32.mrf.mxu0
  %1111 = vmatprep.mubr.f32.mxu0 %v635
  %1112 = vmatmul.mubr.f32.gmra.mxu0 %v634
  %v1113 = vpop.f32.mrf.mxu0
  %v1114 = vadd.f32 0.0, %v1113
  %v1115 = vpop.f32.mrf.mxu0
  %1116 = vmatprep.mubr.f32.mxu0 %v643
  %1117 = vmatmul.mubr.f32.gmra.mxu0 %v642
  %v1118 = vpop.f32.mrf.mxu0
  %v1119 = vadd.f32 0.0, %v1118
  %v1120 = vpop.f32.mrf.mxu0
  %1121 = vmatprep.mubr.f32.mxu0 %v651
  %1122 = vmatmul.mubr.f32.gmra.mxu0 %v650
  %v1123 = vpop.f32.mrf.mxu0
  %v1124 = vadd.f32 0.0, %v1123
  %v1125 = vpop.f32.mrf.mxu0
  %1126 = vmatprep.mubr.f32.mxu0 %v659
  %1127 = vmatmul.mubr.f32.gmra.mxu0 %v658
  %v1128 = vpop.f32.mrf.mxu0
  %v1129 = vadd.f32 0.0, %v1128
  %v1130 = vpop.f32.mrf.mxu0
  %1131 = vmatprep.mubr.f32.mxu0 %v667
  %1132 = vmatmul.mubr.f32.gmra.mxu0 %v666
  %v1133 = vpop.f32.mrf.mxu0
  %v1134 = vadd.f32 0.0, %v1133
  %v1135 = vpop.f32.mrf.mxu0
  %1136 = vmatprep.mubr.f32.mxu0 %v675
  %1137 = vmatmul.mubr.f32.gmra.mxu0 %v674
  %v1138 = vpop.f32.mrf.mxu0
  %v1139 = vadd.f32 0.0, %v1138
  %v1140 = vpop.f32.mrf.mxu0
  %1141 = vmatprep.mubr.f32.mxu0 %v683
  %1142 = vmatmul.mubr.f32.gmra.mxu0 %v682
  %v1143 = vpop.f32.mrf.mxu0
  %v1144 = vadd.f32 0.0, %v1143
  %v1145 = vpop.f32.mrf.mxu0
  %1146 = vmatprep.mubr.f32.mxu0 %v691
  %1147 = vmatmul.mubr.f32.gmra.mxu0 %v690
  %v1148 = vpop.f32.mrf.mxu0
  %v1149 = vadd.f32 0.0, %v1148
  %v1150 = vpop.f32.mrf.mxu0
  %1151 = vmatprep.mubr.f32.mxu0 %v699
  %1152 = vmatmul.mubr.f32.gmra.mxu0 %v698
  %v1153 = vpop.f32.mrf.mxu0
  %v1154 = vadd.f32 0.0, %v1153
  %v1155 = vpop.f32.mrf.mxu0
  %1156 = vmatprep.mubr.f32.mxu0 %v707
  %1157 = vmatmul.mubr.f32.gmra.mxu0 %v706
  %v1158 = vpop.f32.mrf.mxu0
  %v1159 = vadd.f32 0.0, %v1158
  %v1160 = vpop.f32.mrf.mxu0
  %1161 = vmatprep.mubr.f32.mxu0 %v715
  %1162 = vmatmul.mubr.f32.gmra.mxu0 %v714
  %v1163 = vpop.f32.mrf.mxu0
  %v1164 = vadd.f32 0.0, %v1163
  %v1165 = vpop.f32.mrf.mxu0
  %1166 = vmatprep.mubr.f32.mxu0 %v723
  %1167 = vmatmul.mubr.f32.gmra.mxu0 %v722
  %v1168 = vpop.f32.mrf.mxu0
  %v1169 = vadd.f32 0.0, %v1168
  %v1170 = vpop.f32.mrf.mxu0
  %1171 = vmatprep.mubr.f32.mxu0 %v731
  %1172 = vmatmul.mubr.f32.gmra.mxu0 %v730
  %v1173 = vpop.f32.mrf.mxu0
  %v1174 = vadd.f32 0.0, %v1173
  %v1175 = vpop.f32.mrf.mxu0
  %1176 = vmatprep.mubr.f32.mxu0 %v739
  %1177 = vmatmul.mubr.f32.gmra.mxu0 %v738
  %v1178 = vpop.f32.mrf.mxu0
  %v1179 = vadd.f32 0.0, %v1178
  %v1180 = vpop.f32.mrf.mxu0
  %1181 = vmatprep.mubr.f32.mxu0 %v747
  %1182 = vmatmul.mubr.f32.gmra.mxu0 %v746
  %v1183 = vpop.f32.mrf.mxu0
  %v1184 = vadd.f32 0.0, %v1183
  %v1185 = vpop.f32.mrf.mxu0
  %1186 = vmatprep.mubr.f32.mxu0 %v755
  %1187 = vmatmul.mubr.f32.gmra.mxu0 %v754
  %v1188 = vpop.f32.mrf.mxu0
  %v1189 = vadd.f32 0.0, %v1188
  %v1190 = vpop.f32.mrf.mxu0
  %1191 = vmatprep.mubr.f32.mxu0 %v763
  %1192 = vmatmul.mubr.f32.gmra.mxu0 %v762
  %v1193 = vpop.f32.mrf.mxu0
  %v1194 = vadd.f32 0.0, %v1193
  %v1195 = vpop.f32.mrf.mxu0
  %1196 = vmatprep.mubr.f32.mxu0 %v771
  %1197 = vmatmul.mubr.f32.gmra.mxu0 %v770
  %v1198 = vpop.f32.mrf.mxu0
  %v1199 = vadd.f32 0.0, %v1198
  %v1200 = vpop.f32.mrf.mxu0
  %1201 = vmatprep.mubr.f32.mxu0 %v779
  %1202 = vmatmul.mubr.f32.gmra.mxu0 %v778
  %v1203 = vpop.f32.mrf.mxu0
  %v1204 = vadd.f32 0.0, %v1203
  %v1205 = vpop.f32.mrf.mxu0
  %1206 = vmatprep.mubr.f32.mxu0 %v787
  %1207 = vmatmul.mubr.f32.gmra.mxu0 %v786
  %v1208 = vpop.f32.mrf.mxu0
  %v1209 = vadd.f32 0.0, %v1208
  %v1210 = vpop.f32.mrf.mxu0
  %1211 = vmatprep.mubr.f32.mxu0 %v795
  %1212 = vmatmul.mubr.f32.gmra.mxu0 %v794
  %v1213 = vpop.f32.mrf.mxu0
  %v1214 = vadd.f32 0.0, %v1213
  %v1215 = vpop.f32.mrf.mxu0
  %1216 = vmatprep.mubr.f32.mxu0 %v803
  %1217 = vmatmul.mubr.f32.gmra.mxu0 %v802
  %v1218 = vpop.f32.mrf.mxu0
  %v1219 = vadd.f32 0.0, %v1218
  %v1220 = vpop.f32.mrf.mxu0
  %1221 = vmatprep.mubr.f32.mxu0 %v811
  %1222 = vmatmul.mubr.f32.gmra.mxu0 %v810
  %v1223 = vpop.f32.mrf.mxu0
  %v1224 = vadd.f32 0.0, %v1223
  %v1225 = vpop.f32.mrf.mxu0
  %1226 = vmatprep.mubr.f32.mxu0 %v819
  %1227 = vmatmul.mubr.f32.gmra.mxu0 %v818
  %v1228 = vpop.f32.mrf.mxu0
  %v1229 = vadd.f32 0.0, %v1228
  %v1230 = vpop.f32.mrf.mxu0
  %1231 = vmatprep.mubr.f32.mxu0 %v827
  %1232 = vmatmul.mubr.f32.gmra.mxu0 %v826
  %v1233 = vpop.f32.mrf.mxu0
  %v1234 = vadd.f32 0.0, %v1233
  %v1235 = vpop.f32.mrf.mxu0
  %1236 = vmatprep.mubr.f32.mxu0 %v835
  %1237 = vmatmul.mubr.f32.gmra.mxu0 %v834
  %v1238 = vpop.f32.mrf.mxu0
  %v1239 = vadd.f32 0.0, %v1238
  %v1240 = vpop.f32.mrf.mxu0
  %1241 = vmatprep.mubr.f32.mxu0 %v843
  %1242 = vmatmul.mubr.f32.gmra.mxu0 %v842
  %v1243 = vpop.f32.mrf.mxu0
  %v1244 = vadd.f32 0.0, %v1243
  %v1245 = vpop.f32.mrf.mxu0
  %1246 = vmatprep.mubr.f32.mxu0 %v851
  %1247 = vmatmul.mubr.f32.gmra.mxu0 %v850
  %v1248 = vpop.f32.mrf.mxu0
  %v1249 = vadd.f32 0.0, %v1248
  %v1250 = vpop.f32.mrf.mxu0
  %1251 = vmatprep.mubr.f32.mxu0 %v859
  %1252 = vmatmul.mubr.f32.gmra.mxu0 %v858
  %v1253 = vpop.f32.mrf.mxu0
  %v1254 = vadd.f32 0.0, %v1253
  %v1255 = vpop.f32.mrf.mxu0
  %1256 = vmatprep.mubr.f32.mxu0 %v867
  %1257 = vmatmul.mubr.f32.gmra.mxu0 %v866
  %v1258 = vpop.f32.mrf.mxu0
  %v1259 = vadd.f32 0.0, %v1258
  %v1260 = vpop.f32.mrf.mxu0
  %1261 = vmatprep.mubr.f32.mxu0 %v875
  %1262 = vmatmul.mubr.f32.gmra.mxu0 %v874
  %v1263 = vpop.f32.mrf.mxu0
  %v1264 = vadd.f32 0.0, %v1263
  %v1265 = vpop.f32.mrf.mxu0
  %1266 = vdwg.mxu0
  %1267 = vmatprep.subr.mxu0 0.0
  %1268 = vmatpush1.msra.mxu0 %v961
  %1269 = vmatprep.subr.mxu0 0.0
  %1270 = vmatpush1.msra.mxu0 %v960
  %1271 = vmatprep.subr.mxu0 0.0
  %1272 = vmatpush1.msra.mxu0 %v959
  %1273 = vmatprep.subr.mxu0 0.0
  %1274 = vmatpush1.msra.mxu0 %v958
  %1275 = vmatprep.subr.mxu0 0.0
  %1276 = vmatpush1.msra.mxu0 %v957
  %1277 = vmatprep.subr.mxu0 0.0
  %1278 = vmatpush1.msra.mxu0 %v956
  %1279 = vmatprep.subr.mxu0 0.0
  %1280 = vmatpush1.msra.mxu0 %v955
  %1281 = vmatprep.subr.mxu0 0.0
  %1282 = vmatpush1.msra.mxu0 %v954
  %1283 = vmatprep.subr.mxu0 0.0
  %1284 = vmatpush1.msra.mxu0 %v953
  %1285 = vmatprep.subr.mxu0 0.0
  %1286 = vmatpush1.msra.mxu0 %v952
  %1287 = vmatprep.subr.mxu0 0.0
  %1288 = vmatpush1.msra.mxu0 %v951
  %1289 = vmatprep.subr.mxu0 0.0
  %1290 = vmatpush1.msra.mxu0 %v950
  %1291 = vmatprep.subr.mxu0 0.0
  %1292 = vmatpush1.msra.mxu0 %v949
  %1293 = vmatprep.subr.mxu0 0.0
  %1294 = vmatpush1.msra.mxu0 %v948
  %1295 = vmatprep.subr.mxu0 0.0
  %1296 = vmatpush1.msra.mxu0 %v947
  %1297 = vmatprep.subr.mxu0 0.0
  %1298 = vmatpush1.msra.mxu0 %v946
  %1299 = vmatprep.subr.mxu0 0.0
  %1300 = vmatpush2.msra.mxu0 %v977
  %1301 = vmatprep.subr.mxu0 0.0
  %1302 = vmatpush2.msra.mxu0 %v976
  %1303 = vmatprep.subr.mxu0 0.0
  %1304 = vmatpush2.msra.mxu0 %v975
  %1305 = vmatprep.subr.mxu0 0.0
  %1306 = vmatpush2.msra.mxu0 %v974
  %1307 = vmatprep.subr.mxu0 0.0
  %1308 = vmatpush2.msra.mxu0 %v973
  %1309 = vmatprep.subr.mxu0 0.0
  %1310 = vmatpush2.msra.mxu0 %v972
  %1311 = vmatprep.subr.mxu0 0.0
  %1312 = vmatpush2.msra.mxu0 %v971
  %1313 = vmatprep.subr.mxu0 0.0
  %1314 = vmatpush2.msra.mxu0 %v970
  %1315 = vmatprep.subr.mxu0 0.0
  %1316 = vmatpush2.msra.mxu0 %v969
  %1317 = vmatprep.subr.mxu0 0.0
  %1318 = vmatpush2.msra.mxu0 %v968
  %1319 = vmatprep.subr.mxu0 0.0
  %1320 = vmatpush2.msra.mxu0 %v967
  %1321 = vmatprep.subr.mxu0 0.0
  %1322 = vmatpush2.msra.mxu0 %v966
  %1323 = vmatprep.subr.mxu0 0.0
  %1324 = vmatpush2.msra.mxu0 %v965
  %1325 = vmatprep.subr.mxu0 0.0
  %1326 = vmatpush2.msra.mxu0 %v964
  %1327 = vmatprep.subr.mxu0 0.0
  %1328 = vmatpush2.msra.mxu0 %v963
  %1329 = vmatprep.subr.mxu0 0.0
  %1330 = vmatpush2.msra.mxu0 %v962
  %1331 = vmatprep.mubr.f32.mxu0 %v629
  %1332 = vmatmul.mubr.f32.gmra.mxu0 %v628
  %v1333 = vpop.f32.mrf.mxu0
  %v1334 = vadd.f32 %v1109, %v1333
  %v1335 = vpop.f32.mrf.mxu0
  %1336 = vmatprep.mubr.f32.mxu0 %v637
  %1337 = vmatmul.mubr.f32.gmra.mxu0 %v636
  %v1338 = vpop.f32.mrf.mxu0
  %v1339 = vadd.f32 %v1114, %v1338
  %v1340 = vpop.f32.mrf.mxu0
  %1341 = vmatprep.mubr.f32.mxu0 %v645
  %1342 = vmatmul.mubr.f32.gmra.mxu0 %v644
  %v1343 = vpop.f32.mrf.mxu0
  %v1344 = vadd.f32 %v1119, %v1343
  %v1345 = vpop.f32.mrf.mxu0
  %1346 = vmatprep.mubr.f32.mxu0 %v653
  %1347 = vmatmul.mubr.f32.gmra.mxu0 %v652
  %v1348 = vpop.f32.mrf.mxu0
  %v1349 = vadd.f32 %v1124, %v1348
  %v1350 = vpop.f32.mrf.mxu0
  %1351 = vmatprep.mubr.f32.mxu0 %v661
  %1352 = vmatmul.mubr.f32.gmra.mxu0 %v660
  %v1353 = vpop.f32.mrf.mxu0
  %v1354 = vadd.f32 %v1129, %v1353
  %v1355 = vpop.f32.mrf.mxu0
  %1356 = vmatprep.mubr.f32.mxu0 %v669
  %1357 = vmatmul.mubr.f32.gmra.mxu0 %v668
  %v1358 = vpop.f32.mrf.mxu0
  %v1359 = vadd.f32 %v1134, %v1358
  %v1360 = vpop.f32.mrf.mxu0
  %1361 = vmatprep.mubr.f32.mxu0 %v677
  %1362 = vmatmul.mubr.f32.gmra.mxu0 %v676
  %v1363 = vpop.f32.mrf.mxu0
  %v1364 = vadd.f32 %v1139, %v1363
  %v1365 = vpop.f32.mrf.mxu0
  %1366 = vmatprep.mubr.f32.mxu0 %v685
  %1367 = vmatmul.mubr.f32.gmra.mxu0 %v684
  %v1368 = vpop.f32.mrf.mxu0
  %v1369 = vadd.f32 %v1144, %v1368
  %v1370 = vpop.f32.mrf.mxu0
  %1371 = vmatprep.mubr.f32.mxu0 %v693
  %1372 = vmatmul.mubr.f32.gmra.mxu0 %v692
  %v1373 = vpop.f32.mrf.mxu0
  %v1374 = vadd.f32 %v1149, %v1373
  %v1375 = vpop.f32.mrf.mxu0
  %1376 = vmatprep.mubr.f32.mxu0 %v701
  %1377 = vmatmul.mubr.f32.gmra.mxu0 %v700
  %v1378 = vpop.f32.mrf.mxu0
  %v1379 = vadd.f32 %v1154, %v1378
  %v1380 = vpop.f32.mrf.mxu0
  %1381 = vmatprep.mubr.f32.mxu0 %v709
  %1382 = vmatmul.mubr.f32.gmra.mxu0 %v708
  %v1383 = vpop.f32.mrf.mxu0
  %v1384 = vadd.f32 %v1159, %v1383
  %v1385 = vpop.f32.mrf.mxu0
  %1386 = vmatprep.mubr.f32.mxu0 %v717
  %1387 = vmatmul.mubr.f32.gmra.mxu0 %v716
  %v1388 = vpop.f32.mrf.mxu0
  %v1389 = vadd.f32 %v1164, %v1388
  %v1390 = vpop.f32.mrf.mxu0
  %1391 = vmatprep.mubr.f32.mxu0 %v725
  %1392 = vmatmul.mubr.f32.gmra.mxu0 %v724
  %v1393 = vpop.f32.mrf.mxu0
  %v1394 = vadd.f32 %v1169, %v1393
  %v1395 = vpop.f32.mrf.mxu0
  %1396 = vmatprep.mubr.f32.mxu0 %v733
  %1397 = vmatmul.mubr.f32.gmra.mxu0 %v732
  %v1398 = vpop.f32.mrf.mxu0
  %v1399 = vadd.f32 %v1174, %v1398
  %v1400 = vpop.f32.mrf.mxu0
  %1401 = vmatprep.mubr.f32.mxu0 %v741
  %1402 = vmatmul.mubr.f32.gmra.mxu0 %v740
  %v1403 = vpop.f32.mrf.mxu0
  %v1404 = vadd.f32 %v1179, %v1403
  %v1405 = vpop.f32.mrf.mxu0
  %1406 = vmatprep.mubr.f32.mxu0 %v749
  %1407 = vmatmul.mubr.f32.gmra.mxu0 %v748
  %v1408 = vpop.f32.mrf.mxu0
  %v1409 = vadd.f32 %v1184, %v1408
  %v1410 = vpop.f32.mrf.mxu0
  %1411 = vmatprep.mubr.f32.mxu0 %v757
  %1412 = vmatmul.mubr.f32.gmra.mxu0 %v756
  %v1413 = vpop.f32.mrf.mxu0
  %v1414 = vadd.f32 %v1189, %v1413
  %v1415 = vpop.f32.mrf.mxu0
  %1416 = vmatprep.mubr.f32.mxu0 %v765
  %1417 = vmatmul.mubr.f32.gmra.mxu0 %v764
  %v1418 = vpop.f32.mrf.mxu0
  %v1419 = vadd.f32 %v1194, %v1418
  %v1420 = vpop.f32.mrf.mxu0
  %1421 = vmatprep.mubr.f32.mxu0 %v773
  %1422 = vmatmul.mubr.f32.gmra.mxu0 %v772
  %v1423 = vpop.f32.mrf.mxu0
  %v1424 = vadd.f32 %v1199, %v1423
  %v1425 = vpop.f32.mrf.mxu0
  %1426 = vmatprep.mubr.f32.mxu0 %v781
  %1427 = vmatmul.mubr.f32.gmra.mxu0 %v780
  %v1428 = vpop.f32.mrf.mxu0
  %v1429 = vadd.f32 %v1204, %v1428
  %v1430 = vpop.f32.mrf.mxu0
  %1431 = vmatprep.mubr.f32.mxu0 %v789
  %1432 = vmatmul.mubr.f32.gmra.mxu0 %v788
  %v1433 = vpop.f32.mrf.mxu0
  %v1434 = vadd.f32 %v1209, %v1433
  %v1435 = vpop.f32.mrf.mxu0
  %1436 = vmatprep.mubr.f32.mxu0 %v797
  %1437 = vmatmul.mubr.f32.gmra.mxu0 %v796
  %v1438 = vpop.f32.mrf.mxu0
  %v1439 = vadd.f32 %v1214, %v1438
  %v1440 = vpop.f32.mrf.mxu0
  %1441 = vmatprep.mubr.f32.mxu0 %v805
  %1442 = vmatmul.mubr.f32.gmra.mxu0 %v804
  %v1443 = vpop.f32.mrf.mxu0
  %v1444 = vadd.f32 %v1219, %v1443
  %v1445 = vpop.f32.mrf.mxu0
  %1446 = vmatprep.mubr.f32.mxu0 %v813
  %1447 = vmatmul.mubr.f32.gmra.mxu0 %v812
  %v1448 = vpop.f32.mrf.mxu0
  %v1449 = vadd.f32 %v1224, %v1448
  %v1450 = vpop.f32.mrf.mxu0
  %1451 = vmatprep.mubr.f32.mxu0 %v821
  %1452 = vmatmul.mubr.f32.gmra.mxu0 %v820
  %v1453 = vpop.f32.mrf.mxu0
  %v1454 = vadd.f32 %v1229, %v1453
  %v1455 = vpop.f32.mrf.mxu0
  %1456 = vmatprep.mubr.f32.mxu0 %v829
  %1457 = vmatmul.mubr.f32.gmra.mxu0 %v828
  %v1458 = vpop.f32.mrf.mxu0
  %v1459 = vadd.f32 %v1234, %v1458
  %v1460 = vpop.f32.mrf.mxu0
  %1461 = vmatprep.mubr.f32.mxu0 %v837
  %1462 = vmatmul.mubr.f32.gmra.mxu0 %v836
  %v1463 = vpop.f32.mrf.mxu0
  %v1464 = vadd.f32 %v1239, %v1463
  %v1465 = vpop.f32.mrf.mxu0
  %1466 = vmatprep.mubr.f32.mxu0 %v845
  %1467 = vmatmul.mubr.f32.gmra.mxu0 %v844
  %v1468 = vpop.f32.mrf.mxu0
  %v1469 = vadd.f32 %v1244, %v1468
  %v1470 = vpop.f32.mrf.mxu0
  %1471 = vmatprep.mubr.f32.mxu0 %v853
  %1472 = vmatmul.mubr.f32.gmra.mxu0 %v852
  %v1473 = vpop.f32.mrf.mxu0
  %v1474 = vadd.f32 %v1249, %v1473
  %v1475 = vpop.f32.mrf.mxu0
  %1476 = vmatprep.mubr.f32.mxu0 %v861
  %1477 = vmatmul.mubr.f32.gmra.mxu0 %v860
  %v1478 = vpop.f32.mrf.mxu0
  %v1479 = vadd.f32 %v1254, %v1478
  %v1480 = vpop.f32.mrf.mxu0
  %1481 = vmatprep.mubr.f32.mxu0 %v869
  %1482 = vmatmul.mubr.f32.gmra.mxu0 %v868
  %v1483 = vpop.f32.mrf.mxu0
  %v1484 = vadd.f32 %v1259, %v1483
  %v1485 = vpop.f32.mrf.mxu0
  %1486 = vmatprep.mubr.f32.mxu0 %v877
  %1487 = vmatmul.mubr.f32.gmra.mxu0 %v876
  %v1488 = vpop.f32.mrf.mxu0
  %v1489 = vadd.f32 %v1264, %v1488
  %v1490 = vpop.f32.mrf.mxu0
  %1491 = vdwg.mxu0
  %1492 = vmatprep.subr.mxu0 0.0
  %1493 = vmatpush1.msra.mxu0 %v993
  %1494 = vmatprep.subr.mxu0 0.0
  %1495 = vmatpush1.msra.mxu0 %v992
  %1496 = vmatprep.subr.mxu0 0.0
  %1497 = vmatpush1.msra.mxu0 %v991
  %1498 = vmatprep.subr.mxu0 0.0
  %1499 = vmatpush1.msra.mxu0 %v990
  %1500 = vmatprep.subr.mxu0 0.0
  %1501 = vmatpush1.msra.mxu0 %v989
  %1502 = vmatprep.subr.mxu0 0.0
  %1503 = vmatpush1.msra.mxu0 %v988
  %1504 = vmatprep.subr.mxu0 0.0
  %1505 = vmatpush1.msra.mxu0 %v987
  %1506 = vmatprep.subr.mxu0 0.0
  %1507 = vmatpush1.msra.mxu0 %v986
  %1508 = vmatprep.subr.mxu0 0.0
  %1509 = vmatpush1.msra.mxu0 %v985
  %1510 = vmatprep.subr.mxu0 0.0
  %1511 = vmatpush1.msra.mxu0 %v984
  %1512 = vmatprep.subr.mxu0 0.0
  %1513 = vmatpush1.msra.mxu0 %v983
  %1514 = vmatprep.subr.mxu0 0.0
  %1515 = vmatpush1.msra.mxu0 %v982
  %1516 = vmatprep.subr.mxu0 0.0
  %1517 = vmatpush1.msra.mxu0 %v981
  %1518 = vmatprep.subr.mxu0 0.0
  %1519 = vmatpush1.msra.mxu0 %v980
  %1520 = vmatprep.subr.mxu0 0.0
  %1521 = vmatpush1.msra.mxu0 %v979
  %1522 = vmatprep.subr.mxu0 0.0
  %1523 = vmatpush1.msra.mxu0 %v978
  %1524 = vmatprep.subr.mxu0 0.0
  %1525 = vmatpush2.msra.mxu0 %v1009
  %1526 = vmatprep.subr.mxu0 0.0
  %1527 = vmatpush2.msra.mxu0 %v1008
  %1528 = vmatprep.subr.mxu0 0.0
  %1529 = vmatpush2.msra.mxu0 %v1007
  %1530 = vmatprep.subr.mxu0 0.0
  %1531 = vmatpush2.msra.mxu0 %v1006
  %1532 = vmatprep.subr.mxu0 0.0
  %1533 = vmatpush2.msra.mxu0 %v1005
  %1534 = vmatprep.subr.mxu0 0.0
  %1535 = vmatpush2.msra.mxu0 %v1004
  %1536 = vmatprep.subr.mxu0 0.0
  %1537 = vmatpush2.msra.mxu0 %v1003
  %1538 = vmatprep.subr.mxu0 0.0
  %1539 = vmatpush2.msra.mxu0 %v1002
  %1540 = vmatprep.subr.mxu0 0.0
  %1541 = vmatpush2.msra.mxu0 %v1001
  %1542 = vmatprep.subr.mxu0 0.0
  %1543 = vmatpush2.msra.mxu0 %v1000
  %1544 = vmatprep.subr.mxu0 0.0
  %1545 = vmatpush2.msra.mxu0 %v999
  %1546 = vmatprep.subr.mxu0 0.0
  %1547 = vmatpush2.msra.mxu0 %v998
  %1548 = vmatprep.subr.mxu0 0.0
  %1549 = vmatpush2.msra.mxu0 %v997
  %1550 = vmatprep.subr.mxu0 0.0
  %1551 = vmatpush2.msra.mxu0 %v996
  %1552 = vmatprep.subr.mxu0 0.0
  %1553 = vmatpush2.msra.mxu0 %v995
  %1554 = vmatprep.subr.mxu0 0.0
  %1555 = vmatpush2.msra.mxu0 %v994
  %1556 = vmatprep.mubr.f32.mxu0 %v631
  %1557 = vmatmul.mubr.f32.gmra.mxu0 %v630
  %v1558 = vpop.f32.mrf.mxu0
  %v1559 = vadd.f32 %v1334, %v1558
  %v1560 = vpop.f32.mrf.mxu0
  %1561 = vmatprep.mubr.f32.mxu0 %v639
  %1562 = vmatmul.mubr.f32.gmra.mxu0 %v638
  %v1563 = vpop.f32.mrf.mxu0
  %v1564 = vadd.f32 %v1339, %v1563
  %v1565 = vpop.f32.mrf.mxu0
  %1566 = vmatprep.mubr.f32.mxu0 %v647
  %1567 = vmatmul.mubr.f32.gmra.mxu0 %v646
  %v1568 = vpop.f32.mrf.mxu0
  %v1569 = vadd.f32 %v1344, %v1568
  %v1570 = vpop.f32.mrf.mxu0
  %1571 = vmatprep.mubr.f32.mxu0 %v655
  %1572 = vmatmul.mubr.f32.gmra.mxu0 %v654
  %v1573 = vpop.f32.mrf.mxu0
  %v1574 = vadd.f32 %v1349, %v1573
  %v1575 = vpop.f32.mrf.mxu0
  %1576 = vmatprep.mubr.f32.mxu0 %v663
  %1577 = vmatmul.mubr.f32.gmra.mxu0 %v662
  %v1578 = vpop.f32.mrf.mxu0
  %v1579 = vadd.f32 %v1354, %v1578
  %v1580 = vpop.f32.mrf.mxu0
  %1581 = vmatprep.mubr.f32.mxu0 %v671
  %1582 = vmatmul.mubr.f32.gmra.mxu0 %v670
  %v1583 = vpop.f32.mrf.mxu0
  %v1584 = vadd.f32 %v1359, %v1583
  %v1585 = vpop.f32.mrf.mxu0
  %1586 = vmatprep.mubr.f32.mxu0 %v679
  %1587 = vmatmul.mubr.f32.gmra.mxu0 %v678
  %v1588 = vpop.f32.mrf.mxu0
  %v1589 = vadd.f32 %v1364, %v1588
  %v1590 = vpop.f32.mrf.mxu0
  %1591 = vmatprep.mubr.f32.mxu0 %v687
  %1592 = vmatmul.mubr.f32.gmra.mxu0 %v686
  %v1593 = vpop.f32.mrf.mxu0
  %v1594 = vadd.f32 %v1369, %v1593
  %v1595 = vpop.f32.mrf.mxu0
  %1596 = vmatprep.mubr.f32.mxu0 %v695
  %1597 = vmatmul.mubr.f32.gmra.mxu0 %v694
  %v1598 = vpop.f32.mrf.mxu0
  %v1599 = vadd.f32 %v1374, %v1598
  %v1600 = vpop.f32.mrf.mxu0
  %1601 = vmatprep.mubr.f32.mxu0 %v703
  %1602 = vmatmul.mubr.f32.gmra.mxu0 %v702
  %v1603 = vpop.f32.mrf.mxu0
  %v1604 = vadd.f32 %v1379, %v1603
  %v1605 = vpop.f32.mrf.mxu0
  %1606 = vmatprep.mubr.f32.mxu0 %v711
  %1607 = vmatmul.mubr.f32.gmra.mxu0 %v710
  %v1608 = vpop.f32.mrf.mxu0
  %v1609 = vadd.f32 %v1384, %v1608
  %v1610 = vpop.f32.mrf.mxu0
  %1611 = vmatprep.mubr.f32.mxu0 %v719
  %1612 = vmatmul.mubr.f32.gmra.mxu0 %v718
  %v1613 = vpop.f32.mrf.mxu0
  %v1614 = vadd.f32 %v1389, %v1613
  %v1615 = vpop.f32.mrf.mxu0
  %1616 = vmatprep.mubr.f32.mxu0 %v727
  %1617 = vmatmul.mubr.f32.gmra.mxu0 %v726
  %v1618 = vpop.f32.mrf.mxu0
  %v1619 = vadd.f32 %v1394, %v1618
  %v1620 = vpop.f32.mrf.mxu0
  %1621 = vmatprep.mubr.f32.mxu0 %v735
  %1622 = vmatmul.mubr.f32.gmra.mxu0 %v734
  %v1623 = vpop.f32.mrf.mxu0
  %v1624 = vadd.f32 %v1399, %v1623
  %v1625 = vpop.f32.mrf.mxu0
  %1626 = vmatprep.mubr.f32.mxu0 %v743
  %1627 = vmatmul.mubr.f32.gmra.mxu0 %v742
  %v1628 = vpop.f32.mrf.mxu0
  %v1629 = vadd.f32 %v1404, %v1628
  %v1630 = vpop.f32.mrf.mxu0
  %1631 = vmatprep.mubr.f32.mxu0 %v751
  %1632 = vmatmul.mubr.f32.gmra.mxu0 %v750
  %v1633 = vpop.f32.mrf.mxu0
  %v1634 = vadd.f32 %v1409, %v1633
  %v1635 = vpop.f32.mrf.mxu0
  %1636 = vmatprep.mubr.f32.mxu0 %v759
  %1637 = vmatmul.mubr.f32.gmra.mxu0 %v758
  %v1638 = vpop.f32.mrf.mxu0
  %v1639 = vadd.f32 %v1414, %v1638
  %v1640 = vpop.f32.mrf.mxu0
  %1641 = vmatprep.mubr.f32.mxu0 %v767
  %1642 = vmatmul.mubr.f32.gmra.mxu0 %v766
  %v1643 = vpop.f32.mrf.mxu0
  %v1644 = vadd.f32 %v1419, %v1643
  %v1645 = vpop.f32.mrf.mxu0
  %1646 = vmatprep.mubr.f32.mxu0 %v775
  %1647 = vmatmul.mubr.f32.gmra.mxu0 %v774
  %v1648 = vpop.f32.mrf.mxu0
  %v1649 = vadd.f32 %v1424, %v1648
  %v1650 = vpop.f32.mrf.mxu0
  %1651 = vmatprep.mubr.f32.mxu0 %v783
  %1652 = vmatmul.mubr.f32.gmra.mxu0 %v782
  %v1653 = vpop.f32.mrf.mxu0
  %v1654 = vadd.f32 %v1429, %v1653
  %v1655 = vpop.f32.mrf.mxu0
  %1656 = vmatprep.mubr.f32.mxu0 %v791
  %1657 = vmatmul.mubr.f32.gmra.mxu0 %v790
  %v1658 = vpop.f32.mrf.mxu0
  %v1659 = vadd.f32 %v1434, %v1658
  %v1660 = vpop.f32.mrf.mxu0
  %1661 = vmatprep.mubr.f32.mxu0 %v799
  %1662 = vmatmul.mubr.f32.gmra.mxu0 %v798
  %v1663 = vpop.f32.mrf.mxu0
  %v1664 = vadd.f32 %v1439, %v1663
  %v1665 = vpop.f32.mrf.mxu0
  %1666 = vmatprep.mubr.f32.mxu0 %v807
  %1667 = vmatmul.mubr.f32.gmra.mxu0 %v806
  %v1668 = vpop.f32.mrf.mxu0
  %v1669 = vadd.f32 %v1444, %v1668
  %v1670 = vpop.f32.mrf.mxu0
  %1671 = vmatprep.mubr.f32.mxu0 %v815
  %1672 = vmatmul.mubr.f32.gmra.mxu0 %v814
  %v1673 = vpop.f32.mrf.mxu0
  %v1674 = vadd.f32 %v1449, %v1673
  %v1675 = vpop.f32.mrf.mxu0
  %1676 = vmatprep.mubr.f32.mxu0 %v823
  %1677 = vmatmul.mubr.f32.gmra.mxu0 %v822
  %v1678 = vpop.f32.mrf.mxu0
  %v1679 = vadd.f32 %v1454, %v1678
  %v1680 = vpop.f32.mrf.mxu0
  %1681 = vmatprep.mubr.f32.mxu0 %v831
  %1682 = vmatmul.mubr.f32.gmra.mxu0 %v830
  %v1683 = vpop.f32.mrf.mxu0
  %v1684 = vadd.f32 %v1459, %v1683
  %v1685 = vpop.f32.mrf.mxu0
  %1686 = vmatprep.mubr.f32.mxu0 %v839
  %1687 = vmatmul.mubr.f32.gmra.mxu0 %v838
  %v1688 = vpop.f32.mrf.mxu0
  %v1689 = vadd.f32 %v1464, %v1688
  %v1690 = vpop.f32.mrf.mxu0
  %1691 = vmatprep.mubr.f32.mxu0 %v847
  %1692 = vmatmul.mubr.f32.gmra.mxu0 %v846
  %v1693 = vpop.f32.mrf.mxu0
  %v1694 = vadd.f32 %v1469, %v1693
  %v1695 = vpop.f32.mrf.mxu0
  %1696 = vmatprep.mubr.f32.mxu0 %v855
  %1697 = vmatmul.mubr.f32.gmra.mxu0 %v854
  %v1698 = vpop.f32.mrf.mxu0
  %v1699 = vadd.f32 %v1474, %v1698
  %v1700 = vpop.f32.mrf.mxu0
  %1701 = vmatprep.mubr.f32.mxu0 %v863
  %1702 = vmatmul.mubr.f32.gmra.mxu0 %v862
  %v1703 = vpop.f32.mrf.mxu0
  %v1704 = vadd.f32 %v1479, %v1703
  %v1705 = vpop.f32.mrf.mxu0
  %1706 = vmatprep.mubr.f32.mxu0 %v871
  %1707 = vmatmul.mubr.f32.gmra.mxu0 %v870
  %v1708 = vpop.f32.mrf.mxu0
  %v1709 = vadd.f32 %v1484, %v1708
  %v1710 = vpop.f32.mrf.mxu0
  %1711 = vmatprep.mubr.f32.mxu0 %v879
  %1712 = vmatmul.mubr.f32.gmra.mxu0 %v878
  %v1713 = vpop.f32.mrf.mxu0
  %v1714 = vadd.f32 %v1489, %v1713
  %v1715 = vpop.f32.mrf.mxu0
  %1716 = vdwg.mxu0
  %1717 = vmatprep.subr.mxu0 0.0
  %1718 = vmatpush1.msra.mxu0 %v1025
  %1719 = vmatprep.subr.mxu0 0.0
  %1720 = vmatpush1.msra.mxu0 %v1024
  %1721 = vmatprep.subr.mxu0 0.0
  %1722 = vmatpush1.msra.mxu0 %v1023
  %1723 = vmatprep.subr.mxu0 0.0
  %1724 = vmatpush1.msra.mxu0 %v1022
  %1725 = vmatprep.subr.mxu0 0.0
  %1726 = vmatpush1.msra.mxu0 %v1021
  %1727 = vmatprep.subr.mxu0 0.0
  %1728 = vmatpush1.msra.mxu0 %v1020
  %1729 = vmatprep.subr.mxu0 0.0
  %1730 = vmatpush1.msra.mxu0 %v1019
  %1731 = vmatprep.subr.mxu0 0.0
  %1732 = vmatpush1.msra.mxu0 %v1018
  %1733 = vmatprep.subr.mxu0 0.0
  %1734 = vmatpush1.msra.mxu0 %v1017
  %1735 = vmatprep.subr.mxu0 0.0
  %1736 = vmatpush1.msra.mxu0 %v1016
  %1737 = vmatprep.subr.mxu0 0.0
  %1738 = vmatpush1.msra.mxu0 %v1015
  %1739 = vmatprep.subr.mxu0 0.0
  %1740 = vmatpush1.msra.mxu0 %v1014
  %1741 = vmatprep.subr.mxu0 0.0
  %1742 = vmatpush1.msra.mxu0 %v1013
  %1743 = vmatprep.subr.mxu0 0.0
  %1744 = vmatpush1.msra.mxu0 %v1012
  %1745 = vmatprep.subr.mxu0 0.0
  %1746 = vmatpush1.msra.mxu0 %v1011
  %1747 = vmatprep.subr.mxu0 0.0
  %1748 = vmatpush1.msra.mxu0 %v1010
  %1749 = vmatprep.subr.mxu0 0.0
  %1750 = vmatpush2.msra.mxu0 %v1041
  %1751 = vmatprep.subr.mxu0 0.0
  %1752 = vmatpush2.msra.mxu0 %v1040
  %1753 = vmatprep.subr.mxu0 0.0
  %1754 = vmatpush2.msra.mxu0 %v1039
  %1755 = vmatprep.subr.mxu0 0.0
  %1756 = vmatpush2.msra.mxu0 %v1038
  %1757 = vmatprep.subr.mxu0 0.0
  %1758 = vmatpush2.msra.mxu0 %v1037
  %1759 = vmatprep.subr.mxu0 0.0
  %1760 = vmatpush2.msra.mxu0 %v1036
  %1761 = vmatprep.subr.mxu0 0.0
  %1762 = vmatpush2.msra.mxu0 %v1035
  %1763 = vmatprep.subr.mxu0 0.0
  %1764 = vmatpush2.msra.mxu0 %v1034
  %1765 = vmatprep.subr.mxu0 0.0
  %1766 = vmatpush2.msra.mxu0 %v1033
  %1767 = vmatprep.subr.mxu0 0.0
  %1768 = vmatpush2.msra.mxu0 %v1032
  %1769 = vmatprep.subr.mxu0 0.0
  %1770 = vmatpush2.msra.mxu0 %v1031
  %1771 = vmatprep.subr.mxu0 0.0
  %1772 = vmatpush2.msra.mxu0 %v1030
  %1773 = vmatprep.subr.mxu0 0.0
  %1774 = vmatpush2.msra.mxu0 %v1029
  %1775 = vmatprep.subr.mxu0 0.0
  %1776 = vmatpush2.msra.mxu0 %v1028
  %1777 = vmatprep.subr.mxu0 0.0
  %1778 = vmatpush2.msra.mxu0 %v1027
  %1779 = vmatprep.subr.mxu0 0.0
  %1780 = vmatpush2.msra.mxu0 %v1026
  %1781 = vmatprep.mubr.f32.mxu0 %v633
  %1782 = vmatmul.mubr.f32.gmra.mxu0 %v632
  %v1783 = vpop.f32.mrf.mxu0
  %v1784 = vadd.f32 %v1559, %v1783
  %v1785 = vpop.f32.mrf.mxu0
  %1786 = vmatprep.mubr.f32.mxu0 %v641
  %1787 = vmatmul.mubr.f32.gmra.mxu0 %v640
  %v1788 = vpop.f32.mrf.mxu0
  %v1789 = vadd.f32 %v1564, %v1788
  %v1790 = vpop.f32.mrf.mxu0
  %1791 = vmatprep.mubr.f32.mxu0 %v649
  %1792 = vmatmul.mubr.f32.gmra.mxu0 %v648
  %v1793 = vpop.f32.mrf.mxu0
  %v1794 = vadd.f32 %v1569, %v1793
  %v1795 = vpop.f32.mrf.mxu0
  %1796 = vmatprep.mubr.f32.mxu0 %v657
  %1797 = vmatmul.mubr.f32.gmra.mxu0 %v656
  %v1798 = vpop.f32.mrf.mxu0
  %v1799 = vadd.f32 %v1574, %v1798
  %v1800 = vpop.f32.mrf.mxu0
  %1801 = vmatprep.mubr.f32.mxu0 %v665
  %1802 = vmatmul.mubr.f32.gmra.mxu0 %v664
  %v1803 = vpop.f32.mrf.mxu0
  %v1804 = vadd.f32 %v1579, %v1803
  %v1805 = vpop.f32.mrf.mxu0
  %1806 = vmatprep.mubr.f32.mxu0 %v673
  %1807 = vmatmul.mubr.f32.gmra.mxu0 %v672
  %v1808 = vpop.f32.mrf.mxu0
  %v1809 = vadd.f32 %v1584, %v1808
  %v1810 = vpop.f32.mrf.mxu0
  %1811 = vmatprep.mubr.f32.mxu0 %v681
  %1812 = vmatmul.mubr.f32.gmra.mxu0 %v680
  %v1813 = vpop.f32.mrf.mxu0
  %v1814 = vadd.f32 %v1589, %v1813
  %v1815 = vpop.f32.mrf.mxu0
  %1816 = vmatprep.mubr.f32.mxu0 %v689
  %1817 = vmatmul.mubr.f32.gmra.mxu0 %v688
  %v1818 = vpop.f32.mrf.mxu0
  %v1819 = vadd.f32 %v1594, %v1818
  %v1820 = vpop.f32.mrf.mxu0
  %1821 = vmatprep.mubr.f32.mxu0 %v697
  %1822 = vmatmul.mubr.f32.gmra.mxu0 %v696
  %v1823 = vpop.f32.mrf.mxu0
  %v1824 = vadd.f32 %v1599, %v1823
  %v1825 = vpop.f32.mrf.mxu0
  %1826 = vmatprep.mubr.f32.mxu0 %v705
  %1827 = vmatmul.mubr.f32.gmra.mxu0 %v704
  %v1828 = vpop.f32.mrf.mxu0
  %v1829 = vadd.f32 %v1604, %v1828
  %v1830 = vpop.f32.mrf.mxu0
  %1831 = vmatprep.mubr.f32.mxu0 %v713
  %1832 = vmatmul.mubr.f32.gmra.mxu0 %v712
  %v1833 = vpop.f32.mrf.mxu0
  %v1834 = vadd.f32 %v1609, %v1833
  %v1835 = vpop.f32.mrf.mxu0
  %1836 = vmatprep.mubr.f32.mxu0 %v721
  %1837 = vmatmul.mubr.f32.gmra.mxu0 %v720
  %v1838 = vpop.f32.mrf.mxu0
  %v1839 = vadd.f32 %v1614, %v1838
  %v1840 = vpop.f32.mrf.mxu0
  %1841 = vmatprep.mubr.f32.mxu0 %v729
  %1842 = vmatmul.mubr.f32.gmra.mxu0 %v728
  %v1843 = vpop.f32.mrf.mxu0
  %v1844 = vadd.f32 %v1619, %v1843
  %v1845 = vpop.f32.mrf.mxu0
  %1846 = vmatprep.mubr.f32.mxu0 %v737
  %1847 = vmatmul.mubr.f32.gmra.mxu0 %v736
  %v1848 = vpop.f32.mrf.mxu0
  %v1849 = vadd.f32 %v1624, %v1848
  %v1850 = vpop.f32.mrf.mxu0
  %1851 = vmatprep.mubr.f32.mxu0 %v745
  %1852 = vmatmul.mubr.f32.gmra.mxu0 %v744
  %v1853 = vpop.f32.mrf.mxu0
  %v1854 = vadd.f32 %v1629, %v1853
  %v1855 = vpop.f32.mrf.mxu0
  %1856 = vmatprep.mubr.f32.mxu0 %v753
  %1857 = vmatmul.mubr.f32.gmra.mxu0 %v752
  %v1858 = vpop.f32.mrf.mxu0
  %v1859 = vadd.f32 %v1634, %v1858
  %v1860 = vpop.f32.mrf.mxu0
  %1861 = vmatprep.mubr.f32.mxu0 %v761
  %1862 = vmatmul.mubr.f32.gmra.mxu0 %v760
  %v1863 = vpop.f32.mrf.mxu0
  %v1864 = vadd.f32 %v1639, %v1863
  %v1865 = vpop.f32.mrf.mxu0
  %1866 = vmatprep.mubr.f32.mxu0 %v769
  %1867 = vmatmul.mubr.f32.gmra.mxu0 %v768
  %v1868 = vpop.f32.mrf.mxu0
  %v1869 = vadd.f32 %v1644, %v1868
  %v1870 = vpop.f32.mrf.mxu0
  %1871 = vmatprep.mubr.f32.mxu0 %v777
  %1872 = vmatmul.mubr.f32.gmra.mxu0 %v776
  %v1873 = vpop.f32.mrf.mxu0
  %v1874 = vadd.f32 %v1649, %v1873
  %v1875 = vpop.f32.mrf.mxu0
  %1876 = vmatprep.mubr.f32.mxu0 %v785
  %1877 = vmatmul.mubr.f32.gmra.mxu0 %v784
  %v1878 = vpop.f32.mrf.mxu0
  %v1879 = vadd.f32 %v1654, %v1878
  %v1880 = vpop.f32.mrf.mxu0
  %1881 = vmatprep.mubr.f32.mxu0 %v793
  %1882 = vmatmul.mubr.f32.gmra.mxu0 %v792
  %v1883 = vpop.f32.mrf.mxu0
  %v1884 = vadd.f32 %v1659, %v1883
  %v1885 = vpop.f32.mrf.mxu0
  %1886 = vmatprep.mubr.f32.mxu0 %v801
  %1887 = vmatmul.mubr.f32.gmra.mxu0 %v800
  %v1888 = vpop.f32.mrf.mxu0
  %v1889 = vadd.f32 %v1664, %v1888
  %v1890 = vpop.f32.mrf.mxu0
  %1891 = vmatprep.mubr.f32.mxu0 %v809
  %1892 = vmatmul.mubr.f32.gmra.mxu0 %v808
  %v1893 = vpop.f32.mrf.mxu0
  %v1894 = vadd.f32 %v1669, %v1893
  %v1895 = vpop.f32.mrf.mxu0
  %1896 = vmatprep.mubr.f32.mxu0 %v817
  %1897 = vmatmul.mubr.f32.gmra.mxu0 %v816
  %v1898 = vpop.f32.mrf.mxu0
  %v1899 = vadd.f32 %v1674, %v1898
  %v1900 = vpop.f32.mrf.mxu0
  %1901 = vmatprep.mubr.f32.mxu0 %v825
  %1902 = vmatmul.mubr.f32.gmra.mxu0 %v824
  %v1903 = vpop.f32.mrf.mxu0
  %v1904 = vadd.f32 %v1679, %v1903
  %v1905 = vpop.f32.mrf.mxu0
  %1906 = vmatprep.mubr.f32.mxu0 %v833
  %1907 = vmatmul.mubr.f32.gmra.mxu0 %v832
  %v1908 = vpop.f32.mrf.mxu0
  %v1909 = vadd.f32 %v1684, %v1908
  %v1910 = vpop.f32.mrf.mxu0
  %1911 = vmatprep.mubr.f32.mxu0 %v841
  %1912 = vmatmul.mubr.f32.gmra.mxu0 %v840
  %v1913 = vpop.f32.mrf.mxu0
  %v1914 = vadd.f32 %v1689, %v1913
  %v1915 = vpop.f32.mrf.mxu0
  %1916 = vmatprep.mubr.f32.mxu0 %v849
  %1917 = vmatmul.mubr.f32.gmra.mxu0 %v848
  %v1918 = vpop.f32.mrf.mxu0
  %v1919 = vadd.f32 %v1694, %v1918
  %v1920 = vpop.f32.mrf.mxu0
  %1921 = vmatprep.mubr.f32.mxu0 %v857
  %1922 = vmatmul.mubr.f32.gmra.mxu0 %v856
  %v1923 = vpop.f32.mrf.mxu0
  %v1924 = vadd.f32 %v1699, %v1923
  %v1925 = vpop.f32.mrf.mxu0
  %1926 = vmatprep.mubr.f32.mxu0 %v865
  %1927 = vmatmul.mubr.f32.gmra.mxu0 %v864
  %v1928 = vpop.f32.mrf.mxu0
  %v1929 = vadd.f32 %v1704, %v1928
  %v1930 = vpop.f32.mrf.mxu0
  %1931 = vmatprep.mubr.f32.mxu0 %v873
  %1932 = vmatmul.mubr.f32.gmra.mxu0 %v872
  %v1933 = vpop.f32.mrf.mxu0
  %v1934 = vadd.f32 %v1709, %v1933
  %v1935 = vpop.f32.mrf.mxu0
  %1936 = vmatprep.mubr.f32.mxu0 %v881
  %1937 = vmatmul.mubr.f32.gmra.mxu0 %v880
  %v1938 = vpop.f32.mrf.mxu0
  %v1939 = vadd.f32 %v1714, %v1938
  %v1940 = vpop.f32.mrf.mxu0
  %1941 = vdwg.mxu0
  %v1942 = vadd.f32 %v882, %v1784
  %v1943 = vadd.f32 %v883, %v1789
  %v1944 = vadd.f32 %v884, %v1794
  %v1945 = vadd.f32 %v885, %v1799
  %v1946 = vadd.f32 %v886, %v1804
  %v1947 = vadd.f32 %v887, %v1809
  %v1948 = vadd.f32 %v888, %v1814
  %v1949 = vadd.f32 %v889, %v1819
  %v1950 = vadd.f32 %v890, %v1824
  %v1951 = vadd.f32 %v891, %v1829
  %v1952 = vadd.f32 %v892, %v1834
  %v1953 = vadd.f32 %v893, %v1839
  %v1954 = vadd.f32 %v894, %v1844
  %v1955 = vadd.f32 %v895, %v1849
  %v1956 = vadd.f32 %v896, %v1854
  %v1957 = vadd.f32 %v897, %v1859
  %v1958 = vadd.f32 %v898, %v1864
  %v1959 = vadd.f32 %v899, %v1869
  %v1960 = vadd.f32 %v900, %v1874
  %v1961 = vadd.f32 %v901, %v1879
  %v1962 = vadd.f32 %v902, %v1884
  %v1963 = vadd.f32 %v903, %v1889
  %v1964 = vadd.f32 %v904, %v1894
  %v1965 = vadd.f32 %v905, %v1899
  %v1966 = vadd.f32 %v906, %v1904
  %v1967 = vadd.f32 %v907, %v1909
  %v1968 = vadd.f32 %v908, %v1914
  %v1969 = vadd.f32 %v909, %v1919
  %v1970 = vadd.f32 %v910, %v1924
  %v1971 = vadd.f32 %v911, %v1929
  %v1972 = vadd.f32 %v912, %v1934
  %v1973 = vadd.f32 %v913, %v1939
  %vm1974 = vcmask 64512
  %1975 = vst.msk [vmem:[%s2] sm:$0xff] %vm1974, %v1942
  %1976 = vst.msk [vmem:[%s2 + $0x8] sm:$0xff] %vm1974, %v1943
  %1977 = vst.msk [vmem:[%s2 + $0x10] sm:$0xff] %vm1974, %v1944
  %1978 = vst.msk [vmem:[%s2 + $0x18] sm:$0xff] %vm1974, %v1945
  %1979 = vst.msk [vmem:[%s2 + $0x20] sm:$0xff] %vm1974, %v1946
  %1980 = vst.msk [vmem:[%s2 + $0x28] sm:$0xff] %vm1974, %v1947
  %1981 = vst.msk [vmem:[%s2 + $0x30] sm:$0xff] %vm1974, %v1948
  %1982 = vst.msk [vmem:[%s2 + $0x38] sm:$0xff] %vm1974, %v1949
  %1983 = vst.msk [vmem:[%s2 + $0x40] sm:$0xff] %vm1974, %v1950
  %1984 = vst.msk [vmem:[%s2 + $0x48] sm:$0xff] %vm1974, %v1951
  %1985 = vst.msk [vmem:[%s2 + $0x50] sm:$0xff] %vm1974, %v1952
  %1986 = vst.msk [vmem:[%s2 + $0x58] sm:$0xff] %vm1974, %v1953
  %1987 = vst.msk [vmem:[%s2 + $0x60] sm:$0xff] %vm1974, %v1954
  %1988 = vst.msk [vmem:[%s2 + $0x68] sm:$0xff] %vm1974, %v1955
  %1989 = vst.msk [vmem:[%s2 + $0x70] sm:$0xff] %vm1974, %v1956
  %1990 = vst.msk [vmem:[%s2 + $0x78] sm:$0xff] %vm1974, %v1957
  %1991 = vst.msk [vmem:[%s2 + $0x80] sm:$0xff] %vm1974, %v1958
  %1992 = vst.msk [vmem:[%s2 + $0x88] sm:$0xff] %vm1974, %v1959
  %1993 = vst.msk [vmem:[%s2 + $0x90] sm:$0xff] %vm1974, %v1960
  %1994 = vst.msk [vmem:[%s2 + $0x98] sm:$0xff] %vm1974, %v1961
  %1995 = vst.msk [vmem:[%s2 + $0xa0] sm:$0xff] %vm1974, %v1962
  %1996 = vst.msk [vmem:[%s2 + $0xa8] sm:$0xff] %vm1974, %v1963
  %1997 = vst.msk [vmem:[%s2 + $0xb0] sm:$0xff] %vm1974, %v1964
  %1998 = vst.msk [vmem:[%s2 + $0xb8] sm:$0xff] %vm1974, %v1965
  %1999 = vst.msk [vmem:[%s2 + $0xc0] sm:$0xff] %vm1974, %v1966
  %2000 = vst.msk [vmem:[%s2 + $0xc8] sm:$0xff] %vm1974, %v1967
  %2001 = vst.msk [vmem:[%s2 + $0xd0] sm:$0xff] %vm1974, %v1968
  %2002 = vst.msk [vmem:[%s2 + $0xd8] sm:$0xff] %vm1974, %v1969
  %2003 = vst.msk [vmem:[%s2 + $0xe0] sm:$0xff] %vm1974, %v1970
  %2004 = vst.msk [vmem:[%s2 + $0xe8] sm:$0xff] %vm1974, %v1971
  %2005 = vst.msk [vmem:[%s2 + $0xf0] sm:$0xff] %vm1974, %v1972
  %2006 = vst.msk [vmem:[%s2 + $0xf8] sm:$0xff] %vm1974, %v1973
  // Predicated region
  $region14: #{tpu_custom_call.1} parent=0 // pred_check
    _
  $region15: #{tpu_custom_call.1} parent=0 // pred_check_branch
    %2008 = sbr.rel (0) target = $region17
  $region16: #{tpu_custom_call.1} parent=0 // pred_region
    _
  $region17: #{tpu_custom_call.1} parent=0 // pred_fallthru
    _
  // Predicated region
  $region18: #{tpu_custom_call.1} parent=0 // pred_check
    _
  $region19: #{tpu_custom_call.1} parent=0 // pred_check_branch
    %2010 = sbr.rel (0) target = $region21
  $region20: #{tpu_custom_call.1} parent=0 // pred_region
    _
  $region21: #{tpu_custom_call.1} parent=0 // pred_fallthru
    _

</llo_original>
